<compile_context>
chip_gen: v5e
topology: v5e:2x2
jax: 0.10.0
libtpu: 0.0.40
codegen_flags: <defaults>
</compile_context>

<pallas_src>
import math
import functools

import jax
import jax.numpy as jnp
from jax import lax
from jax.experimental import pallas as pl

D_MODEL = 128
NUM_HEADS = 8
D_K = D_MODEL // NUM_HEADS          # 16
D_FF = 512
LN_EPS = 1e-5                       # torch.nn.LayerNorm default


def _tree_reduce(op, vals):
    """Pairwise (tree) reduction — chain depth log2(n) instead of n."""
    vals = list(vals)
    while len(vals) > 1:
        nxt = [op(vals[i], vals[i + 1]) for i in range(0, len(vals) - 1, 2)]
        if len(vals) % 2:
            nxt.append(vals[-1])
        vals = nxt
    return vals[0]


# ------------------------------ fused kernel -------------------------------

def _encoder_layer_kernel(
    x_ref,                       # (N, D)    f32
    mask_ref,                    # (N, N)    f32  block-diag (1 intra-batch)
    wqkv_ref, bqkv_ref,          # (D, 3D)  bf16, (1, 3D) f32
    wo_ref, bo_ref,              # (D, D)   bf16, (1, D)  f32
    g1_ref, be1_ref,             # (1, D)   f32
    w1_ref, b1_ref,              # (D, Dff) bf16, (1, Dff) f32
    w2_ref, b2_ref,              # (Dff, D) bf16, (1, D)  f32
    g2_ref, be2_ref,             # (1, D)   f32
    o_ref,                       # (N, D)   f32
    *, num_heads, d_k, scale):

    d_model = num_heads * d_k
    x = x_ref[...]                                        # (N, D) f32

    # ---- fused Q|K|V projection: one lane-dense MXU dot -------------------
    qkv = jnp.dot(x.astype(jnp.bfloat16), wqkv_ref[...],
                  preferred_element_type=jnp.float32) + bqkv_ref[...]  # (N,3D)

    # ---- per-head scores over ALL rows (no batch loop) ---------------------
    scores = []
    for h in range(num_heads):
        q_h = qkv[:, h * d_k:(h + 1) * d_k]                       # (N, Dk)
        k_h = qkv[:, d_model + h * d_k: d_model + (h + 1) * d_k]  # (N, Dk)
        s = lax.dot_general(q_h, k_h,
                            dimension_numbers=(((1,), (1,)), ((), ())),
                            preferred_element_type=jnp.float32) * scale
        scores.append(s)                                          # (N, N)

    # ---- softmax over the HEADS axis (F.softmax(attn_scores, dim=1)) ------
    # TODO(synk): attention-mask (masked_fill) path not implemented; the
    # module is exercised with mask=None, matching the reference default.
    m = _tree_reduce(jnp.maximum, scores)
    exps = [jnp.exp(s - m) for s in scores]
    denom = _tree_reduce(jnp.add, exps)
    # block-diagonal mask folded into the reciprocal so cross-batch attention
    # weights are zero before the AV matmul (keeps batches independent).
    inv = pl.reciprocal(denom, approx=True) * mask_ref[...]

    # ---- per-head AV, lane-stacked heads, single Wo matmul ----------------
    o_heads = []
    for h in range(num_heads):
        v_h = qkv[:, 2 * d_model + h * d_k: 2 * d_model + (h + 1) * d_k]
        w = exps[h] * inv                                         # (N, N)
        o_heads.append(jnp.dot(w, v_h,
                               preferred_element_type=jnp.float32))  # (N, Dk)
    attn = jnp.concatenate(o_heads, axis=-1)                      # (N, D)
    attn = jnp.dot(attn.astype(jnp.bfloat16), wo_ref[...],
                   preferred_element_type=jnp.float32) + bo_ref[...]

    # ---- residual + LayerNorm 1 (in registers, f32 VPU math) --------------
    z = x + attn
    mean = jnp.mean(z, axis=-1, keepdims=True)
    zc = z - mean
    var = jnp.mean(zc * zc, axis=-1, keepdims=True)
    y1 = zc * lax.rsqrt(var + LN_EPS) * g1_ref[...] + be1_ref[...]

    # ---- feed-forward + residual + LayerNorm 2 -----------------------------
    hdn = jnp.dot(y1.astype(jnp.bfloat16), w1_ref[...],
                  preferred_element_type=jnp.float32) + b1_ref[...]
    hdn = jnp.maximum(hdn, 0.0)                                   # ReLU
    f = jnp.dot(hdn.astype(jnp.bfloat16), w2_ref[...],
                preferred_element_type=jnp.float32) + b2_ref[...]
    z2 = y1 + f
    mean2 = jnp.mean(z2, axis=-1, keepdims=True)
    zc2 = z2 - mean2
    var2 = jnp.mean(zc2 * zc2, axis=-1, keepdims=True)
    o_ref[...] = (zc2 * lax.rsqrt(var2 + LN_EPS)
                  * g2_ref[...] + be2_ref[...])                   # (N,128)


# --------------------------------- wrapper ----------------------------------

def encoder_layer(x, p):
    """EncoderLayer.forward(x, mask=None).  x: (B, S, D_MODEL) float32."""
    b, s, d = x.shape
    n = b * s

    # compile-time block-diagonal mask: 1 where (row, col) are in the same
    # batch element, 0 otherwise.
    eye = jnp.eye(b, dtype=jnp.float32)
    mask = jnp.repeat(jnp.repeat(eye, s, axis=0), s, axis=1)      # (n, n)

    kernel = functools.partial(
        _encoder_layer_kernel,
        num_heads=NUM_HEADS, d_k=D_K, scale=1.0 / math.sqrt(D_K))
    out = pl.pallas_call(
        kernel,
        out_shape=jax.ShapeDtypeStruct((n, d), jnp.float32),
    )(x.reshape(n, d), mask,
      p["wqkv"], p["bqkv"],
      p["wo"], p["bo"],
      p["g1"], p["beta1"],
      p["w1"], p["b1"], p["w2"], p["b2"],
      p["g2"], p["beta2"])
    return out.reshape(b, s, d)


# --------------------------- deterministic init -----------------------------

def init_params(key):
    """nn.Linear-style init; Q/K/V weights are concatenated ONCE into a
    single (D, 3D) matrix and all large weights are stored bf16 (fp32
    accumulation happens in-kernel via preferred_element_type)."""
    ks = jax.random.split(key, 6)

    def lin(k, din, dout):
        kw, kb = jax.random.split(k)
        bound = 1.0 / math.sqrt(din)
        w = jax.random.uniform(kw, (din, dout), jnp.float32, -bound, bound)
        bvec = jax.random.uniform(kb, (dout,), jnp.float32, -bound, bound)
        return w, bvec

    wq, bq = lin(ks[0], D_MODEL, D_MODEL)
    wk, bk = lin(ks[1], D_MODEL, D_MODEL)
    wv, bv = lin(ks[2], D_MODEL, D_MODEL)
    wo, bo = lin(ks[3], D_MODEL, D_MODEL)
    w1, b1 = lin(ks[4], D_MODEL, D_FF)
    w2, b2 = lin(ks[5], D_FF, D_MODEL)

    wqkv = jnp.concatenate([wq, wk, wv], axis=1)          # (D, 3D)
    bqkv = jnp.concatenate([bq, bk, bv]).reshape(1, 3 * D_MODEL)

    return {
        "wqkv": wqkv.astype(jnp.bfloat16), "bqkv": bqkv,
        "wo": wo.astype(jnp.bfloat16), "bo": bo.reshape(1, D_MODEL),
        "g1": jnp.ones((1, D_MODEL), jnp.float32),
        "beta1": jnp.zeros((1, D_MODEL), jnp.float32),
        "w1": w1.astype(jnp.bfloat16), "b1": b1.reshape(1, D_FF),
        "w2": w2.astype(jnp.bfloat16), "b2": b2.reshape(1, D_MODEL),
        "g2": jnp.ones((1, D_MODEL), jnp.float32),
        "beta2": jnp.zeros((1, D_MODEL), jnp.float32),
    }


# ---------------------------------- driver ----------------------------------

if __name__ == "__main__":
    key = jax.random.PRNGKey(0)
    k_x, k_p = jax.random.split(key)

    B, S = 2, 8
    x = jax.random.normal(k_x, (B, S, D_MODEL), jnp.float32)
    params = init_params(k_p)

    fwd = jax.jit(encoder_layer)
    out = jax.block_until_ready(fwd(x, params))

    assert out.shape == (B, S, D_MODEL)
    assert bool(jnp.all(jnp.isfinite(out)))
    print("KERNEL_OK")
</pallas_src>

<mosaic_0001>
module attributes {stable_mosaic.version = 11 : i64} {
  func.func @_encoder_layer_kernel(%arg0: memref<16x128xf32, #tpu.memory_space<vmem>>, %arg1: memref<16x16xf32, #tpu.memory_space<vmem>>, %arg2: memref<128x384xbf16, #tpu.memory_space<vmem>>, %arg3: memref<1x384xf32, #tpu.memory_space<vmem>>, %arg4: memref<128x128xbf16, #tpu.memory_space<vmem>>, %arg5: memref<1x128xf32, #tpu.memory_space<vmem>>, %arg6: memref<1x128xf32, #tpu.memory_space<vmem>>, %arg7: memref<1x128xf32, #tpu.memory_space<vmem>>, %arg8: memref<128x512xbf16, #tpu.memory_space<vmem>>, %arg9: memref<1x512xf32, #tpu.memory_space<vmem>>, %arg10: memref<512x128xbf16, #tpu.memory_space<vmem>>, %arg11: memref<1x128xf32, #tpu.memory_space<vmem>>, %arg12: memref<1x128xf32, #tpu.memory_space<vmem>>, %arg13: memref<1x128xf32, #tpu.memory_space<vmem>>, %arg14: memref<16x128xf32, #tpu.memory_space<vmem>>) attributes {dimension_semantics = [], scalar_prefetch = 0 : i64, scratch_operands = 0 : i64, tpu.core_type = #tpu.core_type<tc>} {
    %c0 = arith.constant 0 : index
    %c0_0 = arith.constant 0 : index
    %0 = vector.load %arg0[%c0, %c0_0] : memref<16x128xf32, #tpu.memory_space<vmem>>, vector<16x128xf32>
    %1 = arith.truncf %0 : vector<16x128xf32> to vector<16x128xbf16>
    %c0_1 = arith.constant 0 : index
    %c0_2 = arith.constant 0 : index
    %2 = vector.load %arg2[%c0_1, %c0_2] : memref<128x384xbf16, #tpu.memory_space<vmem>>, vector<128x384xbf16>
    %cst = arith.constant dense<0.000000e+00> : vector<16x384xf32>
    %3 = tpu.matmul %1, %2, %cst {dimension_numbers = #tpu.dot_dimension_numbers<[1], [0], [0], [1], [0, 0, 1, 1], [], []>} : vector<16x128xbf16>, vector<128x384xbf16>, vector<16x384xf32> -> vector<16x384xf32>
    %c0_3 = arith.constant 0 : index
    %c0_4 = arith.constant 0 : index
    %4 = vector.load %arg3[%c0_3, %c0_4] : memref<1x384xf32, #tpu.memory_space<vmem>>, vector<1x384xf32>
    %5 = vector.broadcast %4 : vector<1x384xf32> to vector<16x384xf32>
    %6 = arith.addf %3, %5 : vector<16x384xf32>
    %7 = vector.extract_strided_slice %6 {offsets = [0, 0], sizes = [16, 16], strides = [1, 1]} : vector<16x384xf32> to vector<16x16xf32>
    %8 = vector.extract_strided_slice %6 {offsets = [0, 128], sizes = [16, 16], strides = [1, 1]} : vector<16x384xf32> to vector<16x16xf32>
    %cst_5 = arith.constant dense<0.000000e+00> : vector<16x16xf32>
    %9 = tpu.matmul %7, %8, %cst_5 {dimension_numbers = #tpu.dot_dimension_numbers<[1], [1], [0], [0], [0, 0, 1, 0], [], []>} : vector<16x16xf32>, vector<16x16xf32>, vector<16x16xf32> -> vector<16x16xf32>
    %cst_6 = arith.constant 2.500000e-01 : f32
    %10 = vector.broadcast %cst_6 : f32 to vector<16x16xf32>
    %11 = arith.mulf %9, %10 : vector<16x16xf32>
    %12 = vector.extract_strided_slice %6 {offsets = [0, 16], sizes = [16, 16], strides = [1, 1]} : vector<16x384xf32> to vector<16x16xf32>
    %13 = vector.extract_strided_slice %6 {offsets = [0, 144], sizes = [16, 16], strides = [1, 1]} : vector<16x384xf32> to vector<16x16xf32>
    %cst_7 = arith.constant dense<0.000000e+00> : vector<16x16xf32>
    %14 = tpu.matmul %12, %13, %cst_7 {dimension_numbers = #tpu.dot_dimension_numbers<[1], [1], [0], [0], [0, 0, 1, 0], [], []>} : vector<16x16xf32>, vector<16x16xf32>, vector<16x16xf32> -> vector<16x16xf32>
    %cst_8 = arith.constant 2.500000e-01 : f32
    %15 = vector.broadcast %cst_8 : f32 to vector<16x16xf32>
    %16 = arith.mulf %14, %15 : vector<16x16xf32>
    %17 = vector.extract_strided_slice %6 {offsets = [0, 32], sizes = [16, 16], strides = [1, 1]} : vector<16x384xf32> to vector<16x16xf32>
    %18 = vector.extract_strided_slice %6 {offsets = [0, 160], sizes = [16, 16], strides = [1, 1]} : vector<16x384xf32> to vector<16x16xf32>
    %cst_9 = arith.constant dense<0.000000e+00> : vector<16x16xf32>
    %19 = tpu.matmul %17, %18, %cst_9 {dimension_numbers = #tpu.dot_dimension_numbers<[1], [1], [0], [0], [0, 0, 1, 0], [], []>} : vector<16x16xf32>, vector<16x16xf32>, vector<16x16xf32> -> vector<16x16xf32>
    %cst_10 = arith.constant 2.500000e-01 : f32
    %20 = vector.broadcast %cst_10 : f32 to vector<16x16xf32>
    %21 = arith.mulf %19, %20 : vector<16x16xf32>
    %22 = vector.extract_strided_slice %6 {offsets = [0, 48], sizes = [16, 16], strides = [1, 1]} : vector<16x384xf32> to vector<16x16xf32>
    %23 = vector.extract_strided_slice %6 {offsets = [0, 176], sizes = [16, 16], strides = [1, 1]} : vector<16x384xf32> to vector<16x16xf32>
    %cst_11 = arith.constant dense<0.000000e+00> : vector<16x16xf32>
    %24 = tpu.matmul %22, %23, %cst_11 {dimension_numbers = #tpu.dot_dimension_numbers<[1], [1], [0], [0], [0, 0, 1, 0], [], []>} : vector<16x16xf32>, vector<16x16xf32>, vector<16x16xf32> -> vector<16x16xf32>
    %cst_12 = arith.constant 2.500000e-01 : f32
    %25 = vector.broadcast %cst_12 : f32 to vector<16x16xf32>
    %26 = arith.mulf %24, %25 : vector<16x16xf32>
    %27 = vector.extract_strided_slice %6 {offsets = [0, 64], sizes = [16, 16], strides = [1, 1]} : vector<16x384xf32> to vector<16x16xf32>
    %28 = vector.extract_strided_slice %6 {offsets = [0, 192], sizes = [16, 16], strides = [1, 1]} : vector<16x384xf32> to vector<16x16xf32>
    %cst_13 = arith.constant dense<0.000000e+00> : vector<16x16xf32>
    %29 = tpu.matmul %27, %28, %cst_13 {dimension_numbers = #tpu.dot_dimension_numbers<[1], [1], [0], [0], [0, 0, 1, 0], [], []>} : vector<16x16xf32>, vector<16x16xf32>, vector<16x16xf32> -> vector<16x16xf32>
    %cst_14 = arith.constant 2.500000e-01 : f32
    %30 = vector.broadcast %cst_14 : f32 to vector<16x16xf32>
    %31 = arith.mulf %29, %30 : vector<16x16xf32>
    %32 = vector.extract_strided_slice %6 {offsets = [0, 80], sizes = [16, 16], strides = [1, 1]} : vector<16x384xf32> to vector<16x16xf32>
    %33 = vector.extract_strided_slice %6 {offsets = [0, 208], sizes = [16, 16], strides = [1, 1]} : vector<16x384xf32> to vector<16x16xf32>
    %cst_15 = arith.constant dense<0.000000e+00> : vector<16x16xf32>
    %34 = tpu.matmul %32, %33, %cst_15 {dimension_numbers = #tpu.dot_dimension_numbers<[1], [1], [0], [0], [0, 0, 1, 0], [], []>} : vector<16x16xf32>, vector<16x16xf32>, vector<16x16xf32> -> vector<16x16xf32>
    %cst_16 = arith.constant 2.500000e-01 : f32
    %35 = vector.broadcast %cst_16 : f32 to vector<16x16xf32>
    %36 = arith.mulf %34, %35 : vector<16x16xf32>
    %37 = vector.extract_strided_slice %6 {offsets = [0, 96], sizes = [16, 16], strides = [1, 1]} : vector<16x384xf32> to vector<16x16xf32>
    %38 = vector.extract_strided_slice %6 {offsets = [0, 224], sizes = [16, 16], strides = [1, 1]} : vector<16x384xf32> to vector<16x16xf32>
    %cst_17 = arith.constant dense<0.000000e+00> : vector<16x16xf32>
    %39 = tpu.matmul %37, %38, %cst_17 {dimension_numbers = #tpu.dot_dimension_numbers<[1], [1], [0], [0], [0, 0, 1, 0], [], []>} : vector<16x16xf32>, vector<16x16xf32>, vector<16x16xf32> -> vector<16x16xf32>
    %cst_18 = arith.constant 2.500000e-01 : f32
    %40 = vector.broadcast %cst_18 : f32 to vector<16x16xf32>
    %41 = arith.mulf %39, %40 : vector<16x16xf32>
    %42 = vector.extract_strided_slice %6 {offsets = [0, 112], sizes = [16, 16], strides = [1, 1]} : vector<16x384xf32> to vector<16x16xf32>
    %43 = vector.extract_strided_slice %6 {offsets = [0, 240], sizes = [16, 16], strides = [1, 1]} : vector<16x384xf32> to vector<16x16xf32>
    %cst_19 = arith.constant dense<0.000000e+00> : vector<16x16xf32>
    %44 = tpu.matmul %42, %43, %cst_19 {dimension_numbers = #tpu.dot_dimension_numbers<[1], [1], [0], [0], [0, 0, 1, 0], [], []>} : vector<16x16xf32>, vector<16x16xf32>, vector<16x16xf32> -> vector<16x16xf32>
    %cst_20 = arith.constant 2.500000e-01 : f32
    %45 = vector.broadcast %cst_20 : f32 to vector<16x16xf32>
    %46 = arith.mulf %44, %45 : vector<16x16xf32>
    %47 = arith.maximumf %11, %16 : vector<16x16xf32>
    %48 = arith.maximumf %21, %26 : vector<16x16xf32>
    %49 = arith.maximumf %31, %36 : vector<16x16xf32>
    %50 = arith.maximumf %41, %46 : vector<16x16xf32>
    %51 = arith.maximumf %47, %48 : vector<16x16xf32>
    %52 = arith.maximumf %49, %50 : vector<16x16xf32>
    %53 = arith.maximumf %51, %52 : vector<16x16xf32>
    %54 = arith.subf %11, %53 : vector<16x16xf32>
    %55 = math.exp %54 : vector<16x16xf32>
    %56 = arith.subf %16, %53 : vector<16x16xf32>
    %57 = math.exp %56 : vector<16x16xf32>
    %58 = arith.subf %21, %53 : vector<16x16xf32>
    %59 = math.exp %58 : vector<16x16xf32>
    %60 = arith.subf %26, %53 : vector<16x16xf32>
    %61 = math.exp %60 : vector<16x16xf32>
    %62 = arith.subf %31, %53 : vector<16x16xf32>
    %63 = math.exp %62 : vector<16x16xf32>
    %64 = arith.subf %36, %53 : vector<16x16xf32>
    %65 = math.exp %64 : vector<16x16xf32>
    %66 = arith.subf %41, %53 : vector<16x16xf32>
    %67 = math.exp %66 : vector<16x16xf32>
    %68 = arith.subf %46, %53 : vector<16x16xf32>
    %69 = math.exp %68 : vector<16x16xf32>
    %70 = arith.addf %55, %57 : vector<16x16xf32>
    %71 = arith.addf %59, %61 : vector<16x16xf32>
    %72 = arith.addf %63, %65 : vector<16x16xf32>
    %73 = arith.addf %67, %69 : vector<16x16xf32>
    %74 = arith.addf %70, %71 : vector<16x16xf32>
    %75 = arith.addf %72, %73 : vector<16x16xf32>
    %76 = arith.addf %74, %75 : vector<16x16xf32>
    %77 = tpu.reciprocal %76 {approx = true} : vector<16x16xf32> -> vector<16x16xf32>
    %c0_21 = arith.constant 0 : index
    %c0_22 = arith.constant 0 : index
    %78 = vector.load %arg1[%c0_21, %c0_22] : memref<16x16xf32, #tpu.memory_space<vmem>>, vector<16x16xf32>
    %79 = arith.mulf %77, %78 : vector<16x16xf32>
    %80 = vector.extract_strided_slice %6 {offsets = [0, 256], sizes = [16, 16], strides = [1, 1]} : vector<16x384xf32> to vector<16x16xf32>
    %81 = arith.mulf %55, %79 : vector<16x16xf32>
    %cst_23 = arith.constant dense<0.000000e+00> : vector<16x16xf32>
    %82 = tpu.matmul %81, %80, %cst_23 {dimension_numbers = #tpu.dot_dimension_numbers<[1], [0], [0], [1], [0, 0, 1, 1], [], []>} : vector<16x16xf32>, vector<16x16xf32>, vector<16x16xf32> -> vector<16x16xf32>
    %83 = vector.extract_strided_slice %6 {offsets = [0, 272], sizes = [16, 16], strides = [1, 1]} : vector<16x384xf32> to vector<16x16xf32>
    %84 = arith.mulf %57, %79 : vector<16x16xf32>
    %cst_24 = arith.constant dense<0.000000e+00> : vector<16x16xf32>
    %85 = tpu.matmul %84, %83, %cst_24 {dimension_numbers = #tpu.dot_dimension_numbers<[1], [0], [0], [1], [0, 0, 1, 1], [], []>} : vector<16x16xf32>, vector<16x16xf32>, vector<16x16xf32> -> vector<16x16xf32>
    %86 = vector.extract_strided_slice %6 {offsets = [0, 288], sizes = [16, 16], strides = [1, 1]} : vector<16x384xf32> to vector<16x16xf32>
    %87 = arith.mulf %59, %79 : vector<16x16xf32>
    %cst_25 = arith.constant dense<0.000000e+00> : vector<16x16xf32>
    %88 = tpu.matmul %87, %86, %cst_25 {dimension_numbers = #tpu.dot_dimension_numbers<[1], [0], [0], [1], [0, 0, 1, 1], [], []>} : vector<16x16xf32>, vector<16x16xf32>, vector<16x16xf32> -> vector<16x16xf32>
    %89 = vector.extract_strided_slice %6 {offsets = [0, 304], sizes = [16, 16], strides = [1, 1]} : vector<16x384xf32> to vector<16x16xf32>
    %90 = arith.mulf %61, %79 : vector<16x16xf32>
    %cst_26 = arith.constant dense<0.000000e+00> : vector<16x16xf32>
    %91 = tpu.matmul %90, %89, %cst_26 {dimension_numbers = #tpu.dot_dimension_numbers<[1], [0], [0], [1], [0, 0, 1, 1], [], []>} : vector<16x16xf32>, vector<16x16xf32>, vector<16x16xf32> -> vector<16x16xf32>
    %92 = vector.extract_strided_slice %6 {offsets = [0, 320], sizes = [16, 16], strides = [1, 1]} : vector<16x384xf32> to vector<16x16xf32>
    %93 = arith.mulf %63, %79 : vector<16x16xf32>
    %cst_27 = arith.constant dense<0.000000e+00> : vector<16x16xf32>
    %94 = tpu.matmul %93, %92, %cst_27 {dimension_numbers = #tpu.dot_dimension_numbers<[1], [0], [0], [1], [0, 0, 1, 1], [], []>} : vector<16x16xf32>, vector<16x16xf32>, vector<16x16xf32> -> vector<16x16xf32>
    %95 = vector.extract_strided_slice %6 {offsets = [0, 336], sizes = [16, 16], strides = [1, 1]} : vector<16x384xf32> to vector<16x16xf32>
    %96 = arith.mulf %65, %79 : vector<16x16xf32>
    %cst_28 = arith.constant dense<0.000000e+00> : vector<16x16xf32>
    %97 = tpu.matmul %96, %95, %cst_28 {dimension_numbers = #tpu.dot_dimension_numbers<[1], [0], [0], [1], [0, 0, 1, 1], [], []>} : vector<16x16xf32>, vector<16x16xf32>, vector<16x16xf32> -> vector<16x16xf32>
    %98 = vector.extract_strided_slice %6 {offsets = [0, 352], sizes = [16, 16], strides = [1, 1]} : vector<16x384xf32> to vector<16x16xf32>
    %99 = arith.mulf %67, %79 : vector<16x16xf32>
    %cst_29 = arith.constant dense<0.000000e+00> : vector<16x16xf32>
    %100 = tpu.matmul %99, %98, %cst_29 {dimension_numbers = #tpu.dot_dimension_numbers<[1], [0], [0], [1], [0, 0, 1, 1], [], []>} : vector<16x16xf32>, vector<16x16xf32>, vector<16x16xf32> -> vector<16x16xf32>
    %101 = vector.extract_strided_slice %6 {offsets = [0, 368], sizes = [16, 16], strides = [1, 1]} : vector<16x384xf32> to vector<16x16xf32>
    %102 = arith.mulf %69, %79 : vector<16x16xf32>
    %cst_30 = arith.constant dense<0.000000e+00> : vector<16x16xf32>
    %103 = tpu.matmul %102, %101, %cst_30 {dimension_numbers = #tpu.dot_dimension_numbers<[1], [0], [0], [1], [0, 0, 1, 1], [], []>} : vector<16x16xf32>, vector<16x16xf32>, vector<16x16xf32> -> vector<16x16xf32>
    %104 = tpu.concatenate %82, %85, %88, %91, %94, %97, %100, %103 in 1 : vector<16x16xf32>, vector<16x16xf32>, vector<16x16xf32>, vector<16x16xf32>, vector<16x16xf32>, vector<16x16xf32>, vector<16x16xf32>, vector<16x16xf32> -> vector<16x128xf32>
    %105 = arith.truncf %104 : vector<16x128xf32> to vector<16x128xbf16>
    %c0_31 = arith.constant 0 : index
    %c0_32 = arith.constant 0 : index
    %106 = vector.load %arg4[%c0_31, %c0_32] : memref<128x128xbf16, #tpu.memory_space<vmem>>, vector<128x128xbf16>
    %cst_33 = arith.constant dense<0.000000e+00> : vector<16x128xf32>
    %107 = tpu.matmul %105, %106, %cst_33 {dimension_numbers = #tpu.dot_dimension_numbers<[1], [0], [0], [1], [0, 0, 1, 1], [], []>} : vector<16x128xbf16>, vector<128x128xbf16>, vector<16x128xf32> -> vector<16x128xf32>
    %c0_34 = arith.constant 0 : index
    %c0_35 = arith.constant 0 : index
    %108 = vector.load %arg5[%c0_34, %c0_35] : memref<1x128xf32, #tpu.memory_space<vmem>>, vector<1x128xf32>
    %109 = vector.broadcast %108 : vector<1x128xf32> to vector<16x128xf32>
    %110 = arith.addf %107, %109 : vector<16x128xf32>
    %111 = arith.addf %0, %110 : vector<16x128xf32>
    %cst_36 = arith.constant dense<0.000000e+00> : vector<16xf32>
    %112 = vector.multi_reduction <add>, %111, %cst_36 [1] : vector<16x128xf32> to vector<16xf32>
    %113 = vector.shape_cast %112 : vector<16xf32> to vector<16x1xf32>
    %cst_37 = arith.constant 1.280000e+02 : f32
    %114 = vector.broadcast %cst_37 : f32 to vector<16x1xf32>
    %115 = arith.divf %113, %114 : vector<16x1xf32>
    %116 = vector.broadcast %115 : vector<16x1xf32> to vector<16x128xf32>
    %117 = arith.subf %111, %116 : vector<16x128xf32>
    %118 = arith.mulf %117, %117 : vector<16x128xf32>
    %cst_38 = arith.constant dense<0.000000e+00> : vector<16xf32>
    %119 = vector.multi_reduction <add>, %118, %cst_38 [1] : vector<16x128xf32> to vector<16xf32>
    %120 = vector.shape_cast %119 : vector<16xf32> to vector<16x1xf32>
    %cst_39 = arith.constant 1.280000e+02 : f32
    %121 = vector.broadcast %cst_39 : f32 to vector<16x1xf32>
    %122 = arith.divf %120, %121 : vector<16x1xf32>
    %cst_40 = arith.constant 9.99999974E-6 : f32
    %123 = vector.broadcast %cst_40 : f32 to vector<16x1xf32>
    %124 = arith.addf %122, %123 : vector<16x1xf32>
    %125 = math.rsqrt %124 : vector<16x1xf32>
    %126 = vector.broadcast %125 : vector<16x1xf32> to vector<16x128xf32>
    %127 = arith.mulf %117, %126 : vector<16x128xf32>
    %c0_41 = arith.constant 0 : index
    %c0_42 = arith.constant 0 : index
    %128 = vector.load %arg6[%c0_41, %c0_42] : memref<1x128xf32, #tpu.memory_space<vmem>>, vector<1x128xf32>
    %129 = vector.broadcast %128 : vector<1x128xf32> to vector<16x128xf32>
    %130 = arith.mulf %127, %129 : vector<16x128xf32>
    %c0_43 = arith.constant 0 : index
    %c0_44 = arith.constant 0 : index
    %131 = vector.load %arg7[%c0_43, %c0_44] : memref<1x128xf32, #tpu.memory_space<vmem>>, vector<1x128xf32>
    %132 = vector.broadcast %131 : vector<1x128xf32> to vector<16x128xf32>
    %133 = arith.addf %130, %132 : vector<16x128xf32>
    %134 = arith.truncf %133 : vector<16x128xf32> to vector<16x128xbf16>
    %c0_45 = arith.constant 0 : index
    %c0_46 = arith.constant 0 : index
    %135 = vector.load %arg8[%c0_45, %c0_46] : memref<128x512xbf16, #tpu.memory_space<vmem>>, vector<128x512xbf16>
    %cst_47 = arith.constant dense<0.000000e+00> : vector<16x512xf32>
    %136 = tpu.matmul %134, %135, %cst_47 {dimension_numbers = #tpu.dot_dimension_numbers<[1], [0], [0], [1], [0, 0, 1, 1], [], []>} : vector<16x128xbf16>, vector<128x512xbf16>, vector<16x512xf32> -> vector<16x512xf32>
    %c0_48 = arith.constant 0 : index
    %c0_49 = arith.constant 0 : index
    %137 = vector.load %arg9[%c0_48, %c0_49] : memref<1x512xf32, #tpu.memory_space<vmem>>, vector<1x512xf32>
    %138 = vector.broadcast %137 : vector<1x512xf32> to vector<16x512xf32>
    %139 = arith.addf %136, %138 : vector<16x512xf32>
    %cst_50 = arith.constant 0.000000e+00 : f32
    %140 = vector.broadcast %cst_50 : f32 to vector<16x512xf32>
    %141 = arith.maximumf %139, %140 : vector<16x512xf32>
    %142 = arith.truncf %141 : vector<16x512xf32> to vector<16x512xbf16>
    %c0_51 = arith.constant 0 : index
    %c0_52 = arith.constant 0 : index
    %143 = vector.load %arg10[%c0_51, %c0_52] : memref<512x128xbf16, #tpu.memory_space<vmem>>, vector<512x128xbf16>
    %cst_53 = arith.constant dense<0.000000e+00> : vector<16x128xf32>
    %144 = tpu.matmul %142, %143, %cst_53 {dimension_numbers = #tpu.dot_dimension_numbers<[1], [0], [0], [1], [0, 0, 1, 1], [], []>} : vector<16x512xbf16>, vector<512x128xbf16>, vector<16x128xf32> -> vector<16x128xf32>
    %c0_54 = arith.constant 0 : index
    %c0_55 = arith.constant 0 : index
    %145 = vector.load %arg11[%c0_54, %c0_55] : memref<1x128xf32, #tpu.memory_space<vmem>>, vector<1x128xf32>
    %146 = vector.broadcast %145 : vector<1x128xf32> to vector<16x128xf32>
    %147 = arith.addf %144, %146 : vector<16x128xf32>
    %148 = arith.addf %133, %147 : vector<16x128xf32>
    %cst_56 = arith.constant dense<0.000000e+00> : vector<16xf32>
    %149 = vector.multi_reduction <add>, %148, %cst_56 [1] : vector<16x128xf32> to vector<16xf32>
    %150 = vector.shape_cast %149 : vector<16xf32> to vector<16x1xf32>
    %cst_57 = arith.constant 1.280000e+02 : f32
    %151 = vector.broadcast %cst_57 : f32 to vector<16x1xf32>
    %152 = arith.divf %150, %151 : vector<16x1xf32>
    %153 = vector.broadcast %152 : vector<16x1xf32> to vector<16x128xf32>
    %154 = arith.subf %148, %153 : vector<16x128xf32>
    %155 = arith.mulf %154, %154 : vector<16x128xf32>
    %cst_58 = arith.constant dense<0.000000e+00> : vector<16xf32>
    %156 = vector.multi_reduction <add>, %155, %cst_58 [1] : vector<16x128xf32> to vector<16xf32>
    %157 = vector.shape_cast %156 : vector<16xf32> to vector<16x1xf32>
    %cst_59 = arith.constant 1.280000e+02 : f32
    %158 = vector.broadcast %cst_59 : f32 to vector<16x1xf32>
    %159 = arith.divf %157, %158 : vector<16x1xf32>
    %cst_60 = arith.constant 9.99999974E-6 : f32
    %160 = vector.broadcast %cst_60 : f32 to vector<16x1xf32>
    %161 = arith.addf %159, %160 : vector<16x1xf32>
    %162 = math.rsqrt %161 : vector<16x1xf32>
    %163 = vector.broadcast %162 : vector<16x1xf32> to vector<16x128xf32>
    %164 = arith.mulf %154, %163 : vector<16x128xf32>
    %c0_61 = arith.constant 0 : index
    %c0_62 = arith.constant 0 : index
    %165 = vector.load %arg12[%c0_61, %c0_62] : memref<1x128xf32, #tpu.memory_space<vmem>>, vector<1x128xf32>
    %166 = vector.broadcast %165 : vector<1x128xf32> to vector<16x128xf32>
    %167 = arith.mulf %164, %166 : vector<16x128xf32>
    %c0_63 = arith.constant 0 : index
    %c0_64 = arith.constant 0 : index
    %168 = vector.load %arg13[%c0_63, %c0_64] : memref<1x128xf32, #tpu.memory_space<vmem>>, vector<1x128xf32>
    %169 = vector.broadcast %168 : vector<1x128xf32> to vector<16x128xf32>
    %170 = arith.addf %167, %169 : vector<16x128xf32>
    %c0_65 = arith.constant 0 : index
    %c0_66 = arith.constant 0 : index
    %171 = vector.load %arg14[%c0_65, %c0_66] : memref<16x128xf32, #tpu.memory_space<vmem>>, vector<16x128xf32>
    tpu.vector_store %arg14[%c0_65, %c0_66], %170 {strides = array<i32>} : memref<16x128xf32, #tpu.memory_space<vmem>>, vector<16x128xf32>,
    return
  }
}

</mosaic_0001>

<llo_original>
// kernel: encoder_layer.1
$region0: #{encoder_layer.1}
  #allocation0 [shape = 'u32[]', space=smem, size = 0x4, offset = 0x4, fixed_abs, tag = 'smem constant byte address 0x4 - core index']
  #allocation1 [shape = 'u32[72,128]{1,0:T(1,128)}', space=vmem, size = 0x9000, scoped, tag = 'internal scratch']
  %s0 = inlined_call_operand.hbm [shape: f32[16,128], index: 0, kind: input, shape index: {}]
  %s1 = inlined_call_operand.vmem [shape: f32[16,16], index: 1, kind: input, shape index: {}]
  %s2 = inlined_call_operand.hbm [shape: bf16[128,384], index: 2, kind: input, shape index: {}]
  %s3 = inlined_call_operand.vmem [shape: f32[1,384], index: 3, kind: input, shape index: {}]
  %s4 = inlined_call_operand.vmem [shape: bf16[128,128], index: 4, kind: input, shape index: {}]
  %s5 = inlined_call_operand.vmem [shape: f32[1,128], index: 5, kind: input, shape index: {}]
  %s6 = inlined_call_operand.vmem [shape: f32[1,128], index: 6, kind: input, shape index: {}]
  %s7 = inlined_call_operand.vmem [shape: f32[1,128], index: 7, kind: input, shape index: {}]
  %s8 = inlined_call_operand.hbm [shape: bf16[128,512], index: 8, kind: input, shape index: {}]
  %s9 = inlined_call_operand.vmem [shape: f32[1,512], index: 9, kind: input, shape index: {}]
  %s10 = inlined_call_operand.hbm [shape: bf16[512,128], index: 10, kind: input, shape index: {}]
  %s11 = inlined_call_operand.vmem [shape: f32[1,128], index: 11, kind: input, shape index: {}]
  %s12 = inlined_call_operand.hbm [shape: f32[1,128], index: 12, kind: input, shape index: {}]
  %s13 = inlined_call_operand.hbm [shape: f32[1,128], index: 13, kind: input, shape index: {}]
  %s14 = inlined_call_operand.hbm [shape: f32[16,128], index: 14, kind: output, shape index: {}]
  %s15 = sld [smem:[#allocation0]]
  $region90: #{encoder_layer.1} parent=0
    _
  %s17 = ssub.s32 1, %s15
  %s18 = scalar_select 0, %s17, %s15
  $region1: #{encoder_layer.1} parent=0
    #allocation2 [shape = 'u8[8192]{0}', space=vmem, size = 0x2000, scoped, tag = 'input window, operand 0, single buffered']
    #allocation3 [shape = 's32[1]{0}', space=sflag, size = 0x4, scoped, tag = 'scoped memory for encoder_layer.1']
    #allocation4 [shape = 's32[1]{0}', space=sflag, size = 0x4, scoped, tag = 'scoped memory for encoder_layer.1']
    #allocation5 [shape = 'u8[98304]{0}', space=vmem, size = 0x18000, scoped, tag = 'input window, operand 2, single buffered']
    #allocation6 [shape = 's32[1]{0}', space=sflag, size = 0x4, scoped, tag = 'scoped memory for encoder_layer.1']
    #allocation7 [shape = 'u8[131072]{0}', space=vmem, size = 0x20000, scoped, tag = 'input window, operand 8, single buffered']
    #allocation8 [shape = 'u8[131072]{0}', space=vmem, size = 0x20000, scoped, tag = 'input window, operand 10, single buffered']
    #allocation9 [shape = 's32[1]{0}', space=sflag, size = 0x4, scoped, tag = 'scoped memory for encoder_layer.1']
    #allocation10 [shape = 'u8[512]{0}', space=vmem, size = 0x400, scoped, tag = 'input window, operand 12, single buffered']
    #allocation11 [shape = 'u8[512]{0}', space=vmem, size = 0x400, scoped, tag = 'input window, operand 13, single buffered']
    #allocation12 [shape = 's32[1]{0}', space=sflag, size = 0x4, scoped, tag = 'scoped memory for encoder_layer.1']
    #allocation13 [shape = 'u8[8192]{0}', space=vmem, size = 0x2000, scoped, tag = 'output window, operand 0, single buffered']
    %19 = vsyncpa [#allocation3], 0
    %20 = vsyncpa [#allocation6], 0
    %21 = vsyncpa [#allocation9], 0
    %22 = vsyncpa [#allocation12], 0
    %23 = vsyncpa [#allocation4], 0
    // Predicated region
    $region2: #{encoder_layer.1} parent=1 // pred_check
      _
    $region3: #{encoder_layer.1} parent=1 // pred_check_branch
      %25 = sbr.rel (0) target = $region5
    $region4: #{encoder_layer.1} parent=1 // pred_region
      %27 = vsyncadd [#allocation3], 0
      %s28 = sshll.u32 %s0, 4
      %s29 = int_to_ptr.hbm [resolvable:$true] %s28
      %s30 = sshll.u32 [#allocation2], 4
      %s31 = int_to_ptr.vmem [resolvable:$true] %s30
      %36 = dma.hbm_to_vmem [thread:$0]  %s29, 256, %s31, [#allocation3], 128, 128, 8
    $region5: #{encoder_layer.1} parent=1 // pred_fallthru
      _
    // Predicated region
    $region6: #{encoder_layer.1} parent=1 // pred_check
      _
    $region7: #{encoder_layer.1} parent=1 // pred_check_branch
      %38 = sbr.rel (0) target = $region9
    $region8: #{encoder_layer.1} parent=1 // pred_region
      _
    $region9: #{encoder_layer.1} parent=1 // pred_fallthru
      _
    // Predicated region
    $region10: #{encoder_layer.1} parent=1 // pred_check
      _
    $region11: #{encoder_layer.1} parent=1 // pred_check_branch
      %40 = sbr.rel (0) target = $region13
    $region12: #{encoder_layer.1} parent=1 // pred_region
      %42 = vsyncadd [#allocation6], 0
      %s43 = sshll.u32 %s2, 4
      %s44 = int_to_ptr.hbm [resolvable:$true] %s43
      %s45 = sshll.u32 [#allocation5], 4
      %s46 = int_to_ptr.vmem [resolvable:$true] %s45
      %51 = dma.hbm_to_vmem [thread:$0]  %s44, 3072, %s46, [#allocation6], 192, 192, 12
    $region13: #{encoder_layer.1} parent=1 // pred_fallthru
      _
    // Predicated region
    $region14: #{encoder_layer.1} parent=1 // pred_check
      _
    $region15: #{encoder_layer.1} parent=1 // pred_check_branch
      %53 = sbr.rel (0) target = $region17
    $region16: #{encoder_layer.1} parent=1 // pred_region
      _
    $region17: #{encoder_layer.1} parent=1 // pred_fallthru
      _
    // Predicated region
    $region18: #{encoder_layer.1} parent=1 // pred_check
      _
    $region19: #{encoder_layer.1} parent=1 // pred_check_branch
      %55 = sbr.rel (0) target = $region21
    $region20: #{encoder_layer.1} parent=1 // pred_region
      _
    $region21: #{encoder_layer.1} parent=1 // pred_fallthru
      _
    // Predicated region
    $region22: #{encoder_layer.1} parent=1 // pred_check
      _
    $region23: #{encoder_layer.1} parent=1 // pred_check_branch
      %57 = sbr.rel (0) target = $region25
    $region24: #{encoder_layer.1} parent=1 // pred_region
      _
    $region25: #{encoder_layer.1} parent=1 // pred_fallthru
      _
    // Predicated region
    $region26: #{encoder_layer.1} parent=1 // pred_check
      _
    $region27: #{encoder_layer.1} parent=1 // pred_check_branch
      %59 = sbr.rel (0) target = $region29
    $region28: #{encoder_layer.1} parent=1 // pred_region
      _
    $region29: #{encoder_layer.1} parent=1 // pred_fallthru
      _
    // Predicated region
    $region30: #{encoder_layer.1} parent=1 // pred_check
      _
    $region31: #{encoder_layer.1} parent=1 // pred_check_branch
      %61 = sbr.rel (0) target = $region33
    $region32: #{encoder_layer.1} parent=1 // pred_region
      _
    $region33: #{encoder_layer.1} parent=1 // pred_fallthru
      _
    // Predicated region
    $region34: #{encoder_layer.1} parent=1 // pred_check
      _
    $region35: #{encoder_layer.1} parent=1 // pred_check_branch
      %63 = sbr.rel (0) target = $region37
    $region36: #{encoder_layer.1} parent=1 // pred_region
      %65 = vsyncadd [#allocation6], 0
      %s66 = sshll.u32 %s8, 4
      %s67 = int_to_ptr.hbm [resolvable:$true] %s66
      %s68 = sshll.u32 [#allocation7], 4
      %s69 = int_to_ptr.vmem [resolvable:$true] %s68
      %74 = dma.hbm_to_vmem [thread:$0]  %s67, 4096, %s69, [#allocation6], 256, 256, 16
    $region37: #{encoder_layer.1} parent=1 // pred_fallthru
      _
    // Predicated region
    $region38: #{encoder_layer.1} parent=1 // pred_check
      _
    $region39: #{encoder_layer.1} parent=1 // pred_check_branch
      %76 = sbr.rel (0) target = $region41
    $region40: #{encoder_layer.1} parent=1 // pred_region
      _
    $region41: #{encoder_layer.1} parent=1 // pred_fallthru
      _
    // Predicated region
    $region42: #{encoder_layer.1} parent=1 // pred_check
      _
    $region43: #{encoder_layer.1} parent=1 // pred_check_branch
      %78 = sbr.rel (0) target = $region45
    $region44: #{encoder_layer.1} parent=1 // pred_region
      %80 = vsyncadd [#allocation9], 0
      %s81 = sshll.u32 %s10, 4
      %s82 = int_to_ptr.hbm [resolvable:$true] %s81
      %s83 = sshll.u32 [#allocation8], 4
      %s84 = int_to_ptr.vmem [resolvable:$true] %s83
      %89 = dma.hbm_to_vmem [thread:$0]  %s82, 4096, %s84, [#allocation9], 64, 64, 4
    $region45: #{encoder_layer.1} parent=1 // pred_fallthru
      _
    // Predicated region
    $region46: #{encoder_layer.1} parent=1 // pred_check
      _
    $region47: #{encoder_layer.1} parent=1 // pred_check_branch
      %91 = sbr.rel (0) target = $region49
    $region48: #{encoder_layer.1} parent=1 // pred_region
      _
    $region49: #{encoder_layer.1} parent=1 // pred_fallthru
      _
    // Predicated region
    $region50: #{encoder_layer.1} parent=1 // pred_check
      _
    $region51: #{encoder_layer.1} parent=1 // pred_check_branch
      %93 = sbr.rel (0) target = $region53
    $region52: #{encoder_layer.1} parent=1 // pred_region
      %95 = vsyncadd [#allocation9], 0
      %s97 = sshll.u32 %s12, 4
      %s98 = int_to_ptr.hbm [resolvable:$true] %s97
      %s99 = sshll.u32 [#allocation10], 4
      %s100 = int_to_ptr.vmem [resolvable:$true] %s99
      %102 = dma.hbm_to_vmem [thread:$0]  %s98, 16, %s100, [#allocation9]
    $region53: #{encoder_layer.1} parent=1 // pred_fallthru
      _
    // Predicated region
    $region54: #{encoder_layer.1} parent=1 // pred_check
      _
    $region55: #{encoder_layer.1} parent=1 // pred_check_branch
      %104 = sbr.rel (0) target = $region57
    $region56: #{encoder_layer.1} parent=1 // pred_region
      %106 = vsyncadd [#allocation12], 0
      %s108 = sshll.u32 %s13, 4
      %s109 = int_to_ptr.hbm [resolvable:$true] %s108
      %s110 = sshll.u32 [#allocation11], 4
      %s111 = int_to_ptr.vmem [resolvable:$true] %s110
      %113 = dma.hbm_to_vmem [thread:$0]  %s109, 16, %s111, [#allocation12]
    $region57: #{encoder_layer.1} parent=1 // pred_fallthru
      _
    // Predicated region
    $region58: #{encoder_layer.1} parent=1 // pred_check
      _
    $region59: #{encoder_layer.1} parent=1 // pred_check_branch
      %115 = sbr.rel (0) target = $region61
    $region60: #{encoder_layer.1} parent=1 // pred_region
      %117 = dma.done [#allocation3], 256
    $region61: #{encoder_layer.1} parent=1 // pred_fallthru
      _
    // Predicated region
    $region62: #{encoder_layer.1} parent=1 // pred_check
      _
    $region63: #{encoder_layer.1} parent=1 // pred_check_branch
      %119 = sbr.rel (0) target = $region65
    $region64: #{encoder_layer.1} parent=1 // pred_region
      %121 = dma.done [#allocation6], 3072
    $region65: #{encoder_layer.1} parent=1 // pred_fallthru
      _
    // Predicated region
    $region66: #{encoder_layer.1} parent=1 // pred_check
      _
    $region67: #{encoder_layer.1} parent=1 // pred_check_branch
      %123 = sbr.rel (0) target = $region69
    $region68: #{encoder_layer.1} parent=1 // pred_region
      %125 = dma.done [#allocation6], 4096
    $region69: #{encoder_layer.1} parent=1 // pred_fallthru
      _
    // Predicated region
    $region70: #{encoder_layer.1} parent=1 // pred_check
      _
    $region71: #{encoder_layer.1} parent=1 // pred_check_branch
      %127 = sbr.rel (0) target = $region73
    $region72: #{encoder_layer.1} parent=1 // pred_region
      %129 = dma.done [#allocation9], 4096
    $region73: #{encoder_layer.1} parent=1 // pred_fallthru
      _
    // Predicated region
    $region74: #{encoder_layer.1} parent=1 // pred_check
      _
    $region75: #{encoder_layer.1} parent=1 // pred_check_branch
      %131 = sbr.rel (0) target = $region77
    $region76: #{encoder_layer.1} parent=1 // pred_region
      %133 = dma.done [#allocation9], 16
    $region77: #{encoder_layer.1} parent=1 // pred_fallthru
      _
    // Predicated region
    $region78: #{encoder_layer.1} parent=1 // pred_check
      _
    $region79: #{encoder_layer.1} parent=1 // pred_check_branch
      %135 = sbr.rel (0) target = $region81
    $region80: #{encoder_layer.1} parent=1 // pred_region
      %137 = dma.done [#allocation12], 16
    $region81: #{encoder_layer.1} parent=1 // pred_fallthru
      _
    %v138 = vld [vmem:[#allocation2] sm:$0xff]
    %v139 = vld [vmem:[#allocation2 + $0x8] sm:$0xff]
    %v140 = vpack.c.bf16 %v139, %v138
    %v141 = vld [vmem:[#allocation5] sm:$0xff]
    %v142 = vld [vmem:[#allocation5 + $0x8] sm:$0xf]
    %v143 = vld [vmem:[#allocation5 + $0xc] sm:$0xff]
    %v144 = vld [vmem:[#allocation5 + $0x14] sm:$0xf]
    %v145 = vld [vmem:[#allocation5 + $0x18] sm:$0xff]
    %v146 = vld [vmem:[#allocation5 + $0x20] sm:$0xf]
    %v147 = vld [vmem:[#allocation5 + $0x24] sm:$0xff]
    %v148 = vld [vmem:[#allocation5 + $0x2c] sm:$0xf]
    %v149 = vld [vmem:[#allocation5 + $0x30] sm:$0xff]
    %v150 = vld [vmem:[#allocation5 + $0x38] sm:$0xf]
    %v151 = vld [vmem:[#allocation5 + $0x3c] sm:$0xff]
    %v152 = vld [vmem:[#allocation5 + $0x44] sm:$0xf]
    %v153 = vld [vmem:[#allocation5 + $0x48] sm:$0xff]
    %v154 = vld [vmem:[#allocation5 + $0x50] sm:$0xf]
    %v155 = vld [vmem:[#allocation5 + $0x54] sm:$0xff]
    %v156 = vld [vmem:[#allocation5 + $0x5c] sm:$0xf]
    %v157 = vld [vmem:[#allocation5 + $0x60] sm:$0xff]
    %v158 = vld [vmem:[#allocation5 + $0x68] sm:$0xf]
    %v159 = vld [vmem:[#allocation5 + $0x6c] sm:$0xff]
    %v160 = vld [vmem:[#allocation5 + $0x74] sm:$0xf]
    %v161 = vld [vmem:[#allocation5 + $0x78] sm:$0xff]
    %v162 = vld [vmem:[#allocation5 + $0x80] sm:$0xf]
    %v163 = vld [vmem:[#allocation5 + $0x84] sm:$0xff]
    %v164 = vld [vmem:[#allocation5 + $0x8c] sm:$0xf]
    %v165 = vld [vmem:[#allocation5 + $0x90] sm:$0xff]
    %v166 = vld [vmem:[#allocation5 + $0x98] sm:$0xf]
    %v167 = vld [vmem:[#allocation5 + $0x9c] sm:$0xff]
    %v168 = vld [vmem:[#allocation5 + $0xa4] sm:$0xf]
    %v169 = vld [vmem:[#allocation5 + $0xa8] sm:$0xff]
    %v170 = vld [vmem:[#allocation5 + $0xb0] sm:$0xf]
    %v171 = vld [vmem:[#allocation5 + $0xb4] sm:$0xff]
    %v172 = vld [vmem:[#allocation5 + $0xbc] sm:$0xf]
    %v173 = vld [vmem:[%s3] sm:$0x7]
    %v175 = vperm.slane %v173, 0
    %v176 = vperm.slane %v173, 1
    %v177 = vperm.slane %v173, 2
    %v213 = vunpack.c.l.b16 %v141
    %v214 = vunpack.c.h.b16 %v141
    %v215 = vunpack.c.l.b16 %v142
    %v216 = vunpack.c.l.b16 %v143
    %v217 = vunpack.c.h.b16 %v143
    %v218 = vunpack.c.l.b16 %v144
    %v219 = vunpack.c.l.b16 %v145
    %v220 = vunpack.c.h.b16 %v145
    %v221 = vunpack.c.l.b16 %v146
    %v222 = vunpack.c.l.b16 %v147
    %v223 = vunpack.c.h.b16 %v147
    %v224 = vunpack.c.l.b16 %v148
    %v225 = vunpack.c.l.b16 %v149
    %v226 = vunpack.c.h.b16 %v149
    %v227 = vunpack.c.l.b16 %v150
    %v228 = vunpack.c.l.b16 %v151
    %v229 = vunpack.c.h.b16 %v151
    %v230 = vunpack.c.l.b16 %v152
    %v231 = vunpack.c.l.b16 %v153
    %v232 = vunpack.c.h.b16 %v153
    %v233 = vunpack.c.l.b16 %v154
    %v234 = vunpack.c.l.b16 %v155
    %v235 = vunpack.c.h.b16 %v155
    %v236 = vunpack.c.l.b16 %v156
    %v237 = vunpack.c.l.b16 %v157
    %v238 = vunpack.c.h.b16 %v157
    %v239 = vunpack.c.l.b16 %v158
    %v240 = vunpack.c.l.b16 %v159
    %v241 = vunpack.c.h.b16 %v159
    %v242 = vunpack.c.l.b16 %v160
    %v243 = vunpack.c.l.b16 %v161
    %v244 = vunpack.c.h.b16 %v161
    %v245 = vunpack.c.l.b16 %v162
    %v246 = vunpack.c.l.b16 %v163
    %v247 = vunpack.c.h.b16 %v163
    %v248 = vunpack.c.l.b16 %v164
    %v249 = vunpack.c.l.b16 %v165
    %v250 = vunpack.c.h.b16 %v165
    %v251 = vunpack.c.l.b16 %v166
    %v252 = vunpack.c.l.b16 %v167
    %v253 = vunpack.c.h.b16 %v167
    %v254 = vunpack.c.l.b16 %v168
    %v255 = vunpack.c.l.b16 %v169
    %v256 = vunpack.c.h.b16 %v169
    %v257 = vunpack.c.l.b16 %v170
    %v258 = vunpack.c.l.b16 %v171
    %v259 = vunpack.c.h.b16 %v171
    %v260 = vunpack.c.l.b16 %v172
    %v261 = vpack.c.b16 %v216, %v213
    %v262 = vpack.c.b16 %v217, %v214
    %v263 = vpack.c.b16 %v218, %v215
    %v264 = vpack.c.b16 %v222, %v219
    %v265 = vpack.c.b16 %v223, %v220
    %v266 = vpack.c.b16 %v224, %v221
    %v267 = vpack.c.b16 %v228, %v225
    %v268 = vpack.c.b16 %v229, %v226
    %v269 = vpack.c.b16 %v230, %v227
    %v270 = vpack.c.b16 %v234, %v231
    %v271 = vpack.c.b16 %v235, %v232
    %v272 = vpack.c.b16 %v236, %v233
    %v273 = vpack.c.b16 %v240, %v237
    %v274 = vpack.c.b16 %v241, %v238
    %v275 = vpack.c.b16 %v242, %v239
    %v276 = vpack.c.b16 %v246, %v243
    %v277 = vpack.c.b16 %v247, %v244
    %v278 = vpack.c.b16 %v248, %v245
    %v279 = vpack.c.b16 %v252, %v249
    %v280 = vpack.c.b16 %v253, %v250
    %v281 = vpack.c.b16 %v254, %v251
    %v282 = vpack.c.b16 %v258, %v255
    %v283 = vpack.c.b16 %v259, %v256
    %v284 = vpack.c.b16 %v260, %v257
    %309 = vmatpush.bf16.msra.mxu0 %v282
    %310 = vmatpush.bf16.msra.mxu0 %v279
    %311 = vmatpush.bf16.msra.mxu0 %v276
    %312 = vmatpush.bf16.msra.mxu0 %v273
    %313 = vmatpush.bf16.msra.mxu0 %v270
    %314 = vmatpush.bf16.msra.mxu0 %v267
    %315 = vmatpush.bf16.msra.mxu0 %v264
    %316 = vmatpush.bf16.msra.mxu0 %v261
    %317 = vmatmul.bf16.gmra.mxu0 %v140
    %v318 = vpop.f32.mrf.mxu0
    %v319 = vadd.f32 %v175, %v318
    %v320 = vpop.f32.mrf.mxu0
    %v321 = vadd.f32 %v175, %v320
    %322 = vdwg.mxu0
    %323 = vmatpush.bf16.msra.mxu0 %v283
    %324 = vmatpush.bf16.msra.mxu0 %v280
    %325 = vmatpush.bf16.msra.mxu0 %v277
    %326 = vmatpush.bf16.msra.mxu0 %v274
    %327 = vmatpush.bf16.msra.mxu0 %v271
    %328 = vmatpush.bf16.msra.mxu0 %v268
    %329 = vmatpush.bf16.msra.mxu0 %v265
    %330 = vmatpush.bf16.msra.mxu0 %v262
    %331 = vmatmul.bf16.gmra.mxu0 %v140
    %v332 = vpop.f32.mrf.mxu0
    %v333 = vadd.f32 %v176, %v332
    %v334 = vpop.f32.mrf.mxu0
    %v335 = vadd.f32 %v176, %v334
    %336 = vdwg.mxu0
    %337 = vmatpush.bf16.msra.mxu0 %v284
    %338 = vmatpush.bf16.msra.mxu0 %v281
    %339 = vmatpush.bf16.msra.mxu0 %v278
    %340 = vmatpush.bf16.msra.mxu0 %v275
    %341 = vmatpush.bf16.msra.mxu0 %v272
    %342 = vmatpush.bf16.msra.mxu0 %v269
    %343 = vmatpush.bf16.msra.mxu0 %v266
    %344 = vmatpush.bf16.msra.mxu0 %v263
    %345 = vmatmul.bf16.gmra.mxu0 %v140
    %v346 = vpop.f32.mrf.mxu0
    %v347 = vadd.f32 %v177, %v346
    %v348 = vpop.f32.mrf.mxu0
    %v349 = vadd.f32 %v177, %v348
    %350 = vdwg.mxu0
    %vm351 = vcmask 130048
    %v353 = vsel %vm351, %v319, 0
    %v356 = vsel %vm351, %v321, 0
    %v359 = vsel %vm351, %v333, 0
    %v362 = vsel %vm351, %v335, 0
    %364 = vmatpush.xpose.msra.mxu0 0.0
    %365 = vmatpush.xpose.msra.mxu0 0.0
    %366 = vmatpush.xpose.msra.mxu0 0.0
    %367 = vmatpush.xpose.msra.mxu0 0.0
    %368 = vmatpush.xpose.msra.mxu0 0.0
    %369 = vmatpush.xpose.msra.mxu0 0.0
    %370 = vmatpush.xpose.msra.mxu0 0.0
    %371 = vmatpush.xpose.msra.mxu0 0.0
    %372 = vmatpush.xpose.msra.mxu0 0.0
    %373 = vmatpush.xpose.msra.mxu0 0.0
    %374 = vmatpush.xpose.msra.mxu0 0.0
    %375 = vmatpush.xpose.msra.mxu0 0.0
    %376 = vmatpush.xpose.msra.mxu0 0.0
    %377 = vmatpush.xpose.msra.mxu0 0.0
    %378 = vmatpush.xpose.msra.mxu0 %v362
    %379 = vmatpush.xpose.msra.mxu0 %v359
    %380 = vmatmul.f32.gmra.mxu0 %v353
    %v381 = vpop.f32.mrf.mxu0
    %v382 = vadd.f32 0.0, %v381
    %383 = vmatmul.f32.gmra.mxu0 %v356
    %v384 = vpop.f32.mrf.mxu0
    %v385 = vadd.f32 0.0, %v384
    %386 = vdwg.mxu0
    %v387 = vmul.f32 %v382, 0.25
    %v388 = vmul.f32 %v385, 0.25
    %389 = vrot.lane.b32.xlu0 %v319, 112
    %v390 = vpop.permute.xlu0 %389
    %391 = vrot.lane.b32.xlu0 %v321, 112
    %v392 = vpop.permute.xlu0 %391
    %393 = vrot.lane.b32.xlu0 %v333, 112
    %v394 = vpop.permute.xlu0 %393
    %395 = vrot.lane.b32.xlu0 %v335, 112
    %v396 = vpop.permute.xlu0 %395
    %v397 = vsel %vm351, %v390, 0
    %v399 = vsel %vm351, %v392, 0
    %v401 = vsel %vm351, %v394, 0
    %v403 = vsel %vm351, %v396, 0
    %405 = vmatpush.xpose.msra.mxu0 0.0
    %406 = vmatpush.xpose.msra.mxu0 0.0
    %407 = vmatpush.xpose.msra.mxu0 0.0
    %408 = vmatpush.xpose.msra.mxu0 0.0
    %409 = vmatpush.xpose.msra.mxu0 0.0
    %410 = vmatpush.xpose.msra.mxu0 0.0
    %411 = vmatpush.xpose.msra.mxu0 0.0
    %412 = vmatpush.xpose.msra.mxu0 0.0
    %413 = vmatpush.xpose.msra.mxu0 0.0
    %414 = vmatpush.xpose.msra.mxu0 0.0
    %415 = vmatpush.xpose.msra.mxu0 0.0
    %416 = vmatpush.xpose.msra.mxu0 0.0
    %417 = vmatpush.xpose.msra.mxu0 0.0
    %418 = vmatpush.xpose.msra.mxu0 0.0
    %419 = vmatpush.xpose.msra.mxu0 %v403
    %420 = vmatpush.xpose.msra.mxu0 %v401
    %421 = vmatmul.f32.gmra.mxu0 %v397
    %v422 = vpop.f32.mrf.mxu0
    %v423 = vadd.f32 0.0, %v422
    %424 = vmatmul.f32.gmra.mxu0 %v399
    %v425 = vpop.f32.mrf.mxu0
    %v426 = vadd.f32 0.0, %v425
    %427 = vdwg.mxu0
    %v428 = vmul.f32 %v423, 0.25
    %v429 = vmul.f32 %v426, 0.25
    %430 = vrot.lane.b32.xlu0 %v319, 96
    %v431 = vpop.permute.xlu0 %430
    %432 = vrot.lane.b32.xlu0 %v321, 96
    %v433 = vpop.permute.xlu0 %432
    %434 = vrot.lane.b32.xlu0 %v333, 96
    %v435 = vpop.permute.xlu0 %434
    %436 = vrot.lane.b32.xlu0 %v335, 96
    %v437 = vpop.permute.xlu0 %436
    %v438 = vsel %vm351, %v431, 0
    %v440 = vsel %vm351, %v433, 0
    %v442 = vsel %vm351, %v435, 0
    %v444 = vsel %vm351, %v437, 0
    %446 = vmatpush.xpose.msra.mxu0 0.0
    %447 = vmatpush.xpose.msra.mxu0 0.0
    %448 = vmatpush.xpose.msra.mxu0 0.0
    %449 = vmatpush.xpose.msra.mxu0 0.0
    %450 = vmatpush.xpose.msra.mxu0 0.0
    %451 = vmatpush.xpose.msra.mxu0 0.0
    %452 = vmatpush.xpose.msra.mxu0 0.0
    %453 = vmatpush.xpose.msra.mxu0 0.0
    %454 = vmatpush.xpose.msra.mxu0 0.0
    %455 = vmatpush.xpose.msra.mxu0 0.0
    %456 = vmatpush.xpose.msra.mxu0 0.0
    %457 = vmatpush.xpose.msra.mxu0 0.0
    %458 = vmatpush.xpose.msra.mxu0 0.0
    %459 = vmatpush.xpose.msra.mxu0 0.0
    %460 = vmatpush.xpose.msra.mxu0 %v444
    %461 = vmatpush.xpose.msra.mxu0 %v442
    %462 = vmatmul.f32.gmra.mxu0 %v438
    %v463 = vpop.f32.mrf.mxu0
    %v464 = vadd.f32 0.0, %v463
    %465 = vmatmul.f32.gmra.mxu0 %v440
    %v466 = vpop.f32.mrf.mxu0
    %v467 = vadd.f32 0.0, %v466
    %468 = vdwg.mxu0
    %v469 = vmul.f32 %v464, 0.25
    %v470 = vmul.f32 %v467, 0.25
    %471 = vrot.lane.b32.xlu0 %v319, 80
    %v472 = vpop.permute.xlu0 %471
    %473 = vrot.lane.b32.xlu0 %v321, 80
    %v474 = vpop.permute.xlu0 %473
    %475 = vrot.lane.b32.xlu0 %v333, 80
    %v476 = vpop.permute.xlu0 %475
    %477 = vrot.lane.b32.xlu0 %v335, 80
    %v478 = vpop.permute.xlu0 %477
    %v479 = vsel %vm351, %v472, 0
    %v481 = vsel %vm351, %v474, 0
    %v483 = vsel %vm351, %v476, 0
    %v485 = vsel %vm351, %v478, 0
    %487 = vmatpush.xpose.msra.mxu0 0.0
    %488 = vmatpush.xpose.msra.mxu0 0.0
    %489 = vmatpush.xpose.msra.mxu0 0.0
    %490 = vmatpush.xpose.msra.mxu0 0.0
    %491 = vmatpush.xpose.msra.mxu0 0.0
    %492 = vmatpush.xpose.msra.mxu0 0.0
    %493 = vmatpush.xpose.msra.mxu0 0.0
    %494 = vmatpush.xpose.msra.mxu0 0.0
    %495 = vmatpush.xpose.msra.mxu0 0.0
    %496 = vmatpush.xpose.msra.mxu0 0.0
    %497 = vmatpush.xpose.msra.mxu0 0.0
    %498 = vmatpush.xpose.msra.mxu0 0.0
    %499 = vmatpush.xpose.msra.mxu0 0.0
    %500 = vmatpush.xpose.msra.mxu0 0.0
    %501 = vmatpush.xpose.msra.mxu0 %v485
    %502 = vmatpush.xpose.msra.mxu0 %v483
    %503 = vmatmul.f32.gmra.mxu0 %v479
    %v504 = vpop.f32.mrf.mxu0
    %v505 = vadd.f32 0.0, %v504
    %506 = vmatmul.f32.gmra.mxu0 %v481
    %v507 = vpop.f32.mrf.mxu0
    %v508 = vadd.f32 0.0, %v507
    %509 = vdwg.mxu0
    %v510 = vmul.f32 %v505, 0.25
    %v511 = vmul.f32 %v508, 0.25
    %512 = vrot.lane.b32.xlu0 %v319, 64
    %v513 = vpop.permute.xlu0 %512
    %514 = vrot.lane.b32.xlu0 %v321, 64
    %v515 = vpop.permute.xlu0 %514
    %516 = vrot.lane.b32.xlu0 %v333, 64
    %v517 = vpop.permute.xlu0 %516
    %518 = vrot.lane.b32.xlu0 %v335, 64
    %v519 = vpop.permute.xlu0 %518
    %v520 = vsel %vm351, %v513, 0
    %v522 = vsel %vm351, %v515, 0
    %v524 = vsel %vm351, %v517, 0
    %v526 = vsel %vm351, %v519, 0
    %528 = vmatpush.xpose.msra.mxu0 0.0
    %529 = vmatpush.xpose.msra.mxu0 0.0
    %530 = vmatpush.xpose.msra.mxu0 0.0
    %531 = vmatpush.xpose.msra.mxu0 0.0
    %532 = vmatpush.xpose.msra.mxu0 0.0
    %533 = vmatpush.xpose.msra.mxu0 0.0
    %534 = vmatpush.xpose.msra.mxu0 0.0
    %535 = vmatpush.xpose.msra.mxu0 0.0
    %536 = vmatpush.xpose.msra.mxu0 0.0
    %537 = vmatpush.xpose.msra.mxu0 0.0
    %538 = vmatpush.xpose.msra.mxu0 0.0
    %539 = vmatpush.xpose.msra.mxu0 0.0
    %540 = vmatpush.xpose.msra.mxu0 0.0
    %541 = vmatpush.xpose.msra.mxu0 0.0
    %542 = vmatpush.xpose.msra.mxu0 %v526
    %543 = vmatpush.xpose.msra.mxu0 %v524
    %544 = vmatmul.f32.gmra.mxu0 %v520
    %v545 = vpop.f32.mrf.mxu0
    %v546 = vadd.f32 0.0, %v545
    %547 = vmatmul.f32.gmra.mxu0 %v522
    %v548 = vpop.f32.mrf.mxu0
    %v549 = vadd.f32 0.0, %v548
    %550 = vdwg.mxu0
    %v551 = vmul.f32 %v546, 0.25
    %v552 = vmul.f32 %v549, 0.25
    %553 = vrot.lane.b32.xlu0 %v319, 48
    %v554 = vpop.permute.xlu0 %553
    %555 = vrot.lane.b32.xlu0 %v321, 48
    %v556 = vpop.permute.xlu0 %555
    %557 = vrot.lane.b32.xlu0 %v333, 48
    %v558 = vpop.permute.xlu0 %557
    %559 = vrot.lane.b32.xlu0 %v335, 48
    %v560 = vpop.permute.xlu0 %559
    %v561 = vsel %vm351, %v554, 0
    %v563 = vsel %vm351, %v556, 0
    %v565 = vsel %vm351, %v558, 0
    %v567 = vsel %vm351, %v560, 0
    %569 = vmatpush.xpose.msra.mxu0 0.0
    %570 = vmatpush.xpose.msra.mxu0 0.0
    %571 = vmatpush.xpose.msra.mxu0 0.0
    %572 = vmatpush.xpose.msra.mxu0 0.0
    %573 = vmatpush.xpose.msra.mxu0 0.0
    %574 = vmatpush.xpose.msra.mxu0 0.0
    %575 = vmatpush.xpose.msra.mxu0 0.0
    %576 = vmatpush.xpose.msra.mxu0 0.0
    %577 = vmatpush.xpose.msra.mxu0 0.0
    %578 = vmatpush.xpose.msra.mxu0 0.0
    %579 = vmatpush.xpose.msra.mxu0 0.0
    %580 = vmatpush.xpose.msra.mxu0 0.0
    %581 = vmatpush.xpose.msra.mxu0 0.0
    %582 = vmatpush.xpose.msra.mxu0 0.0
    %583 = vmatpush.xpose.msra.mxu0 %v567
    %584 = vmatpush.xpose.msra.mxu0 %v565
    %585 = vmatmul.f32.gmra.mxu0 %v561
    %v586 = vpop.f32.mrf.mxu0
    %v587 = vadd.f32 0.0, %v586
    %588 = vmatmul.f32.gmra.mxu0 %v563
    %v589 = vpop.f32.mrf.mxu0
    %v590 = vadd.f32 0.0, %v589
    %591 = vdwg.mxu0
    %v592 = vmul.f32 %v587, 0.25
    %v593 = vmul.f32 %v590, 0.25
    %594 = vrot.lane.b32.xlu0 %v319, 32
    %v595 = vpop.permute.xlu0 %594
    %596 = vrot.lane.b32.xlu0 %v321, 32
    %v597 = vpop.permute.xlu0 %596
    %598 = vrot.lane.b32.xlu0 %v333, 32
    %v599 = vpop.permute.xlu0 %598
    %600 = vrot.lane.b32.xlu0 %v335, 32
    %v601 = vpop.permute.xlu0 %600
    %v602 = vsel %vm351, %v595, 0
    %v604 = vsel %vm351, %v597, 0
    %v606 = vsel %vm351, %v599, 0
    %v608 = vsel %vm351, %v601, 0
    %610 = vmatpush.xpose.msra.mxu0 0.0
    %611 = vmatpush.xpose.msra.mxu0 0.0
    %612 = vmatpush.xpose.msra.mxu0 0.0
    %613 = vmatpush.xpose.msra.mxu0 0.0
    %614 = vmatpush.xpose.msra.mxu0 0.0
    %615 = vmatpush.xpose.msra.mxu0 0.0
    %616 = vmatpush.xpose.msra.mxu0 0.0
    %617 = vmatpush.xpose.msra.mxu0 0.0
    %618 = vmatpush.xpose.msra.mxu0 0.0
    %619 = vmatpush.xpose.msra.mxu0 0.0
    %620 = vmatpush.xpose.msra.mxu0 0.0
    %621 = vmatpush.xpose.msra.mxu0 0.0
    %622 = vmatpush.xpose.msra.mxu0 0.0
    %623 = vmatpush.xpose.msra.mxu0 0.0
    %624 = vmatpush.xpose.msra.mxu0 %v608
    %625 = vmatpush.xpose.msra.mxu0 %v606
    %626 = vmatmul.f32.gmra.mxu0 %v602
    %v627 = vpop.f32.mrf.mxu0
    %v628 = vadd.f32 0.0, %v627
    %629 = vmatmul.f32.gmra.mxu0 %v604
    %v630 = vpop.f32.mrf.mxu0
    %v631 = vadd.f32 0.0, %v630
    %632 = vdwg.mxu0
    %v633 = vmul.f32 %v628, 0.25
    %v634 = vmul.f32 %v631, 0.25
    %635 = vrot.lane.b32.xlu0 %v319, 16
    %v636 = vpop.permute.xlu0 %635
    %637 = vrot.lane.b32.xlu0 %v321, 16
    %v638 = vpop.permute.xlu0 %637
    %639 = vrot.lane.b32.xlu0 %v333, 16
    %v640 = vpop.permute.xlu0 %639
    %641 = vrot.lane.b32.xlu0 %v335, 16
    %v642 = vpop.permute.xlu0 %641
    %v643 = vsel %vm351, %v636, 0
    %v645 = vsel %vm351, %v638, 0
    %v647 = vsel %vm351, %v640, 0
    %v649 = vsel %vm351, %v642, 0
    %651 = vmatpush.xpose.msra.mxu0 0.0
    %652 = vmatpush.xpose.msra.mxu0 0.0
    %653 = vmatpush.xpose.msra.mxu0 0.0
    %654 = vmatpush.xpose.msra.mxu0 0.0
    %655 = vmatpush.xpose.msra.mxu0 0.0
    %656 = vmatpush.xpose.msra.mxu0 0.0
    %657 = vmatpush.xpose.msra.mxu0 0.0
    %658 = vmatpush.xpose.msra.mxu0 0.0
    %659 = vmatpush.xpose.msra.mxu0 0.0
    %660 = vmatpush.xpose.msra.mxu0 0.0
    %661 = vmatpush.xpose.msra.mxu0 0.0
    %662 = vmatpush.xpose.msra.mxu0 0.0
    %663 = vmatpush.xpose.msra.mxu0 0.0
    %664 = vmatpush.xpose.msra.mxu0 0.0
    %665 = vmatpush.xpose.msra.mxu0 %v649
    %666 = vmatpush.xpose.msra.mxu0 %v647
    %667 = vmatmul.f32.gmra.mxu0 %v643
    %v668 = vpop.f32.mrf.mxu0
    %v669 = vadd.f32 0.0, %v668
    %670 = vmatmul.f32.gmra.mxu0 %v645
    %v671 = vpop.f32.mrf.mxu0
    %v672 = vadd.f32 0.0, %v671
    %673 = vdwg.mxu0
    %v674 = vmul.f32 %v669, 0.25
    %v675 = vmul.f32 %v672, 0.25
    %v676 = vmax.f32 %v387, %v428
    %v677 = vmax.f32 %v388, %v429
    %v678 = vmax.f32 %v469, %v510
    %v679 = vmax.f32 %v470, %v511
    %v680 = vmax.f32 %v551, %v592
    %v681 = vmax.f32 %v552, %v593
    %v682 = vmax.f32 %v633, %v674
    %v683 = vmax.f32 %v634, %v675
    %v684 = vmax.f32 %v676, %v678
    %v685 = vmax.f32 %v677, %v679
    %v686 = vmax.f32 %v680, %v682
    %v687 = vmax.f32 %v681, %v683
    %v688 = vmax.f32 %v684, %v686
    %v689 = vmax.f32 %v685, %v687
    %v690 = vsub.f32 %v387, %v688
    %v691 = vsub.f32 %v388, %v689
    %v692 = vmul.f32 %v690, 1.442695
    %v693 = vpow.pop %v692
    %v694 = vmul.f32 %v691, 1.442695
    %v695 = vpow.pop %v694
    %v696 = vsub.f32 %v428, %v688
    %v697 = vsub.f32 %v429, %v689
    %v698 = vmul.f32 %v696, 1.442695
    %v699 = vpow.pop %v698
    %v700 = vmul.f32 %v697, 1.442695
    %v701 = vpow.pop %v700
    %v702 = vsub.f32 %v469, %v688
    %v703 = vsub.f32 %v470, %v689
    %v704 = vmul.f32 %v702, 1.442695
    %v705 = vpow.pop %v704
    %v706 = vmul.f32 %v703, 1.442695
    %v707 = vpow.pop %v706
    %v708 = vsub.f32 %v510, %v688
    %v709 = vsub.f32 %v511, %v689
    %v710 = vmul.f32 %v708, 1.442695
    %v711 = vpow.pop %v710
    %v712 = vmul.f32 %v709, 1.442695
    %v713 = vpow.pop %v712
    %v714 = vsub.f32 %v551, %v688
    %v715 = vsub.f32 %v552, %v689
    %v716 = vmul.f32 %v714, 1.442695
    %v717 = vpow.pop %v716
    %v718 = vmul.f32 %v715, 1.442695
    %v719 = vpow.pop %v718
    %v720 = vsub.f32 %v592, %v688
    %v721 = vsub.f32 %v593, %v689
    %v722 = vmul.f32 %v720, 1.442695
    %v723 = vpow.pop %v722
    %v724 = vmul.f32 %v721, 1.442695
    %v725 = vpow.pop %v724
    %v726 = vsub.f32 %v633, %v688
    %v727 = vsub.f32 %v634, %v689
    %v728 = vmul.f32 %v726, 1.442695
    %v729 = vpow.pop %v728
    %v730 = vmul.f32 %v727, 1.442695
    %v731 = vpow.pop %v730
    %v732 = vsub.f32 %v674, %v688
    %v733 = vsub.f32 %v675, %v689
    %v734 = vmul.f32 %v732, 1.442695
    %v735 = vpow.pop %v734
    %v736 = vmul.f32 %v733, 1.442695
    %v737 = vpow.pop %v736
    %v738 = vadd.f32 %v693, %v699
    %v739 = vadd.f32 %v695, %v701
    %v740 = vadd.f32 %v705, %v711
    %v741 = vadd.f32 %v707, %v713
    %v742 = vadd.f32 %v717, %v723
    %v743 = vadd.f32 %v719, %v725
    %v744 = vadd.f32 %v729, %v735
    %v745 = vadd.f32 %v731, %v737
    %v746 = vadd.f32 %v738, %v740
    %v747 = vadd.f32 %v739, %v741
    %v748 = vadd.f32 %v742, %v744
    %v749 = vadd.f32 %v743, %v745
    %v750 = vadd.f32 %v746, %v748
    %v751 = vadd.f32 %v747, %v749
    %v752 = vrcp.pop %v750
    %v753 = vrcp.pop %v751
    %v754 = vld [vmem:[%s1] sm:$0xff]
    %v755 = vld [vmem:[%s1 + $0x8] sm:$0xff]
    %v756 = vmul.f32 %v752, %v754
    %v757 = vmul.f32 %v753, %v755
    %v758 = vmul.f32 %v693, %v756
    %v759 = vmul.f32 %v695, %v757
    %v761 = vsel %vm351, %v758, 0
    %v764 = vsel %vm351, %v759, 0
    %766 = vmatpush.msra.mxu0 0.0
    %767 = vmatpush.msra.mxu0 0.0
    %768 = vmatpush.msra.mxu0 0.0
    %769 = vmatpush.msra.mxu0 0.0
    %770 = vmatpush.msra.mxu0 0.0
    %771 = vmatpush.msra.mxu0 0.0
    %772 = vmatpush.msra.mxu0 0.0
    %773 = vmatpush.msra.mxu0 0.0
    %774 = vmatpush.msra.mxu0 0.0
    %775 = vmatpush.msra.mxu0 0.0
    %776 = vmatpush.msra.mxu0 0.0
    %777 = vmatpush.msra.mxu0 0.0
    %778 = vmatpush.msra.mxu0 0.0
    %779 = vmatpush.msra.mxu0 0.0
    %780 = vmatpush.msra.mxu0 %v349
    %781 = vmatpush.msra.mxu0 %v347
    %782 = vmatmul.f32.gmra.mxu0 %v761
    %v783 = vpop.f32.mrf.mxu0
    %v784 = vadd.f32 0.0, %v783
    %785 = vmatmul.f32.gmra.mxu0 %v764
    %v786 = vpop.f32.mrf.mxu0
    %v787 = vadd.f32 0.0, %v786
    %788 = vdwg.mxu0
    %v789 = vmul.f32 %v699, %v756
    %v790 = vmul.f32 %v701, %v757
    %793 = vrot.lane.b32.xlu0 %v347, 112
    %v794 = vpop.permute.xlu0 %793
    %795 = vrot.lane.b32.xlu0 %v349, 112
    %v796 = vpop.permute.xlu0 %795
    %v800 = vsel %vm351, %v789, 0
    %v803 = vsel %vm351, %v790, 0
    %805 = vmatpush.msra.mxu0 0.0
    %806 = vmatpush.msra.mxu0 0.0
    %807 = vmatpush.msra.mxu0 0.0
    %808 = vmatpush.msra.mxu0 0.0
    %809 = vmatpush.msra.mxu0 0.0
    %810 = vmatpush.msra.mxu0 0.0
    %811 = vmatpush.msra.mxu0 0.0
    %812 = vmatpush.msra.mxu0 0.0
    %813 = vmatpush.msra.mxu0 0.0
    %814 = vmatpush.msra.mxu0 0.0
    %815 = vmatpush.msra.mxu0 0.0
    %816 = vmatpush.msra.mxu0 0.0
    %817 = vmatpush.msra.mxu0 0.0
    %818 = vmatpush.msra.mxu0 0.0
    %819 = vmatpush.msra.mxu0 %v796
    %820 = vmatpush.msra.mxu0 %v794
    %821 = vmatmul.f32.gmra.mxu0 %v800
    %v822 = vpop.f32.mrf.mxu0
    %v823 = vadd.f32 0.0, %v822
    %824 = vmatmul.f32.gmra.mxu0 %v803
    %v825 = vpop.f32.mrf.mxu0
    %v826 = vadd.f32 0.0, %v825
    %827 = vdwg.mxu0
    %v828 = vmul.f32 %v705, %v756
    %v829 = vmul.f32 %v707, %v757
    %830 = vrot.lane.b32.xlu0 %v347, 96
    %v831 = vpop.permute.xlu0 %830
    %832 = vrot.lane.b32.xlu0 %v349, 96
    %v833 = vpop.permute.xlu0 %832
    %v837 = vsel %vm351, %v828, 0
    %v840 = vsel %vm351, %v829, 0
    %842 = vmatpush.msra.mxu0 0.0
    %843 = vmatpush.msra.mxu0 0.0
    %844 = vmatpush.msra.mxu0 0.0
    %845 = vmatpush.msra.mxu0 0.0
    %846 = vmatpush.msra.mxu0 0.0
    %847 = vmatpush.msra.mxu0 0.0
    %848 = vmatpush.msra.mxu0 0.0
    %849 = vmatpush.msra.mxu0 0.0
    %850 = vmatpush.msra.mxu0 0.0
    %851 = vmatpush.msra.mxu0 0.0
    %852 = vmatpush.msra.mxu0 0.0
    %853 = vmatpush.msra.mxu0 0.0
    %854 = vmatpush.msra.mxu0 0.0
    %855 = vmatpush.msra.mxu0 0.0
    %856 = vmatpush.msra.mxu0 %v833
    %857 = vmatpush.msra.mxu0 %v831
    %858 = vmatmul.f32.gmra.mxu0 %v837
    %v859 = vpop.f32.mrf.mxu0
    %v860 = vadd.f32 0.0, %v859
    %861 = vmatmul.f32.gmra.mxu0 %v840
    %v862 = vpop.f32.mrf.mxu0
    %v863 = vadd.f32 0.0, %v862
    %864 = vdwg.mxu0
    %v865 = vmul.f32 %v711, %v756
    %v866 = vmul.f32 %v713, %v757
    %867 = vrot.lane.b32.xlu0 %v347, 80
    %v868 = vpop.permute.xlu0 %867
    %869 = vrot.lane.b32.xlu0 %v349, 80
    %v870 = vpop.permute.xlu0 %869
    %v874 = vsel %vm351, %v865, 0
    %v877 = vsel %vm351, %v866, 0
    %879 = vmatpush.msra.mxu0 0.0
    %880 = vmatpush.msra.mxu0 0.0
    %881 = vmatpush.msra.mxu0 0.0
    %882 = vmatpush.msra.mxu0 0.0
    %883 = vmatpush.msra.mxu0 0.0
    %884 = vmatpush.msra.mxu0 0.0
    %885 = vmatpush.msra.mxu0 0.0
    %886 = vmatpush.msra.mxu0 0.0
    %887 = vmatpush.msra.mxu0 0.0
    %888 = vmatpush.msra.mxu0 0.0
    %889 = vmatpush.msra.mxu0 0.0
    %890 = vmatpush.msra.mxu0 0.0
    %891 = vmatpush.msra.mxu0 0.0
    %892 = vmatpush.msra.mxu0 0.0
    %893 = vmatpush.msra.mxu0 %v870
    %894 = vmatpush.msra.mxu0 %v868
    %895 = vmatmul.f32.gmra.mxu0 %v874
    %v896 = vpop.f32.mrf.mxu0
    %v897 = vadd.f32 0.0, %v896
    %898 = vmatmul.f32.gmra.mxu0 %v877
    %v899 = vpop.f32.mrf.mxu0
    %v900 = vadd.f32 0.0, %v899
    %901 = vdwg.mxu0
    %v902 = vmul.f32 %v717, %v756
    %v903 = vmul.f32 %v719, %v757
    %904 = vrot.lane.b32.xlu0 %v347, 64
    %v905 = vpop.permute.xlu0 %904
    %906 = vrot.lane.b32.xlu0 %v349, 64
    %v907 = vpop.permute.xlu0 %906
    %v911 = vsel %vm351, %v902, 0
    %v914 = vsel %vm351, %v903, 0
    %916 = vmatpush.msra.mxu0 0.0
    %917 = vmatpush.msra.mxu0 0.0
    %918 = vmatpush.msra.mxu0 0.0
    %919 = vmatpush.msra.mxu0 0.0
    %920 = vmatpush.msra.mxu0 0.0
    %921 = vmatpush.msra.mxu0 0.0
    %922 = vmatpush.msra.mxu0 0.0
    %923 = vmatpush.msra.mxu0 0.0
    %924 = vmatpush.msra.mxu0 0.0
    %925 = vmatpush.msra.mxu0 0.0
    %926 = vmatpush.msra.mxu0 0.0
    %927 = vmatpush.msra.mxu0 0.0
    %928 = vmatpush.msra.mxu0 0.0
    %929 = vmatpush.msra.mxu0 0.0
    %930 = vmatpush.msra.mxu0 %v907
    %931 = vmatpush.msra.mxu0 %v905
    %932 = vmatmul.f32.gmra.mxu0 %v911
    %v933 = vpop.f32.mrf.mxu0
    %v934 = vadd.f32 0.0, %v933
    %935 = vmatmul.f32.gmra.mxu0 %v914
    %v936 = vpop.f32.mrf.mxu0
    %v937 = vadd.f32 0.0, %v936
    %938 = vdwg.mxu0
    %v939 = vmul.f32 %v723, %v756
    %v940 = vmul.f32 %v725, %v757
    %941 = vrot.lane.b32.xlu0 %v347, 48
    %v942 = vpop.permute.xlu0 %941
    %943 = vrot.lane.b32.xlu0 %v349, 48
    %v944 = vpop.permute.xlu0 %943
    %v948 = vsel %vm351, %v939, 0
    %v951 = vsel %vm351, %v940, 0
    %953 = vmatpush.msra.mxu0 0.0
    %954 = vmatpush.msra.mxu0 0.0
    %955 = vmatpush.msra.mxu0 0.0
    %956 = vmatpush.msra.mxu0 0.0
    %957 = vmatpush.msra.mxu0 0.0
    %958 = vmatpush.msra.mxu0 0.0
    %959 = vmatpush.msra.mxu0 0.0
    %960 = vmatpush.msra.mxu0 0.0
    %961 = vmatpush.msra.mxu0 0.0
    %962 = vmatpush.msra.mxu0 0.0
    %963 = vmatpush.msra.mxu0 0.0
    %964 = vmatpush.msra.mxu0 0.0
    %965 = vmatpush.msra.mxu0 0.0
    %966 = vmatpush.msra.mxu0 0.0
    %967 = vmatpush.msra.mxu0 %v944
    %968 = vmatpush.msra.mxu0 %v942
    %969 = vmatmul.f32.gmra.mxu0 %v948
    %v970 = vpop.f32.mrf.mxu0
    %v971 = vadd.f32 0.0, %v970
    %972 = vmatmul.f32.gmra.mxu0 %v951
    %v973 = vpop.f32.mrf.mxu0
    %v974 = vadd.f32 0.0, %v973
    %975 = vdwg.mxu0
    %v976 = vmul.f32 %v729, %v756
    %v977 = vmul.f32 %v731, %v757
    %978 = vrot.lane.b32.xlu0 %v347, 32
    %v979 = vpop.permute.xlu0 %978
    %980 = vrot.lane.b32.xlu0 %v349, 32
    %v981 = vpop.permute.xlu0 %980
    %v985 = vsel %vm351, %v976, 0
    %v988 = vsel %vm351, %v977, 0
    %990 = vmatpush.msra.mxu0 0.0
    %991 = vmatpush.msra.mxu0 0.0
    %992 = vmatpush.msra.mxu0 0.0
    %993 = vmatpush.msra.mxu0 0.0
    %994 = vmatpush.msra.mxu0 0.0
    %995 = vmatpush.msra.mxu0 0.0
    %996 = vmatpush.msra.mxu0 0.0
    %997 = vmatpush.msra.mxu0 0.0
    %998 = vmatpush.msra.mxu0 0.0
    %999 = vmatpush.msra.mxu0 0.0
    %1000 = vmatpush.msra.mxu0 0.0
    %1001 = vmatpush.msra.mxu0 0.0
    %1002 = vmatpush.msra.mxu0 0.0
    %1003 = vmatpush.msra.mxu0 0.0
    %1004 = vmatpush.msra.mxu0 %v981
    %1005 = vmatpush.msra.mxu0 %v979
    %1006 = vmatmul.f32.gmra.mxu0 %v985
    %v1007 = vpop.f32.mrf.mxu0
    %v1008 = vadd.f32 0.0, %v1007
    %1009 = vmatmul.f32.gmra.mxu0 %v988
    %v1010 = vpop.f32.mrf.mxu0
    %v1011 = vadd.f32 0.0, %v1010
    %1012 = vdwg.mxu0
    %v1013 = vmul.f32 %v735, %v756
    %v1014 = vmul.f32 %v737, %v757
    %1015 = vrot.lane.b32.xlu0 %v347, 16
    %v1016 = vpop.permute.xlu0 %1015
    %1017 = vrot.lane.b32.xlu0 %v349, 16
    %v1018 = vpop.permute.xlu0 %1017
    %v1022 = vsel %vm351, %v1013, 0
    %v1025 = vsel %vm351, %v1014, 0
    %1027 = vmatpush.msra.mxu0 0.0
    %1028 = vmatpush.msra.mxu0 0.0
    %1029 = vmatpush.msra.mxu0 0.0
    %1030 = vmatpush.msra.mxu0 0.0
    %1031 = vmatpush.msra.mxu0 0.0
    %1032 = vmatpush.msra.mxu0 0.0
    %1033 = vmatpush.msra.mxu0 0.0
    %1034 = vmatpush.msra.mxu0 0.0
    %1035 = vmatpush.msra.mxu0 0.0
    %1036 = vmatpush.msra.mxu0 0.0
    %1037 = vmatpush.msra.mxu0 0.0
    %1038 = vmatpush.msra.mxu0 0.0
    %1039 = vmatpush.msra.mxu0 0.0
    %1040 = vmatpush.msra.mxu0 0.0
    %1041 = vmatpush.msra.mxu0 %v1018
    %1042 = vmatpush.msra.mxu0 %v1016
    %1043 = vmatmul.f32.gmra.mxu0 %v1022
    %v1044 = vpop.f32.mrf.mxu0
    %v1045 = vadd.f32 0.0, %v1044
    %1046 = vmatmul.f32.gmra.mxu0 %v1025
    %v1047 = vpop.f32.mrf.mxu0
    %v1048 = vadd.f32 0.0, %v1047
    %1049 = vdwg.mxu0
    %1052 = vrot.lane.b32.xlu0 %v823, 16
    %v1053 = vpop.permute.xlu0 %1052
    %1054 = vrot.lane.b32.xlu0 %v826, 16
    %v1055 = vpop.permute.xlu0 %1054
    %1060 = vrot.lane.b32.xlu0 %v860, 32
    %v1061 = vpop.permute.xlu0 %1060
    %1062 = vrot.lane.b32.xlu0 %v863, 32
    %v1063 = vpop.permute.xlu0 %1062
    %1068 = vrot.lane.b32.xlu0 %v897, 48
    %v1069 = vpop.permute.xlu0 %1068
    %1070 = vrot.lane.b32.xlu0 %v900, 48
    %v1071 = vpop.permute.xlu0 %1070
    %1076 = vrot.lane.b32.xlu0 %v934, 64
    %v1077 = vpop.permute.xlu0 %1076
    %1078 = vrot.lane.b32.xlu0 %v937, 64
    %v1079 = vpop.permute.xlu0 %1078
    %1084 = vrot.lane.b32.xlu0 %v971, 80
    %v1085 = vpop.permute.xlu0 %1084
    %1086 = vrot.lane.b32.xlu0 %v974, 80
    %v1087 = vpop.permute.xlu0 %1086
    %1092 = vrot.lane.b32.xlu0 %v1008, 96
    %v1093 = vpop.permute.xlu0 %1092
    %1094 = vrot.lane.b32.xlu0 %v1011, 96
    %v1095 = vpop.permute.xlu0 %1094
    %1100 = vrot.lane.b32.xlu0 %v1045, 112
    %v1101 = vpop.permute.xlu0 %1100
    %1102 = vrot.lane.b32.xlu0 %v1048, 112
    %v1103 = vpop.permute.xlu0 %1102
    %v1106 = vsel %vm351, %v784, %v1053
    %v1107 = vsel %vm351, %v787, %v1055
    %vm1108 = vcmask 261120
    %v1109 = vsel %vm1108, %v1106, %v1061
    %v1110 = vsel %vm1108, %v1107, %v1063
    %vm1111 = vcmask 392192
    %v1112 = vsel %vm1111, %v1109, %v1069
    %v1113 = vsel %vm1111, %v1110, %v1071
    %vm1114 = vcmask 523264
    %v1115 = vsel %vm1114, %v1112, %v1077
    %v1116 = vsel %vm1114, %v1113, %v1079
    %vm1117 = vcmask 654336
    %v1118 = vsel %vm1117, %v1115, %v1085
    %v1119 = vsel %vm1117, %v1116, %v1087
    %vm1120 = vcmask 785408
    %v1121 = vsel %vm1120, %v1118, %v1093
    %v1122 = vsel %vm1120, %v1119, %v1095
    %vm1123 = vcmask 916480
    %v1124 = vsel %vm1123, %v1121, %v1101
    %v1125 = vsel %vm1123, %v1122, %v1103
    %v1126 = vpack.c.bf16 %v1125, %v1124
    %v1127 = vld [vmem:[%s4] sm:$0xf]
    %v1128 = vld [vmem:[%s4 + $0x4] sm:$0xf]
    %v1129 = vld [vmem:[%s4 + $0x8] sm:$0xf]
    %v1130 = vld [vmem:[%s4 + $0xc] sm:$0xf]
    %v1131 = vld [vmem:[%s4 + $0x10] sm:$0xf]
    %v1132 = vld [vmem:[%s4 + $0x14] sm:$0xf]
    %v1133 = vld [vmem:[%s4 + $0x18] sm:$0xf]
    %v1134 = vld [vmem:[%s4 + $0x1c] sm:$0xf]
    %v1135 = vld [vmem:[%s4 + $0x20] sm:$0xf]
    %v1136 = vld [vmem:[%s4 + $0x24] sm:$0xf]
    %v1137 = vld [vmem:[%s4 + $0x28] sm:$0xf]
    %v1138 = vld [vmem:[%s4 + $0x2c] sm:$0xf]
    %v1139 = vld [vmem:[%s4 + $0x30] sm:$0xf]
    %v1140 = vld [vmem:[%s4 + $0x34] sm:$0xf]
    %v1141 = vld [vmem:[%s4 + $0x38] sm:$0xf]
    %v1142 = vld [vmem:[%s4 + $0x3c] sm:$0xf]
    %v1143 = vld [vmem:[%s5] sm:$0x1]
    %v1145 = vperm.slane %v1143, 0
    %v1163 = vunpack.c.l.b16 %v1127
    %v1164 = vunpack.c.l.b16 %v1128
    %v1165 = vunpack.c.l.b16 %v1129
    %v1166 = vunpack.c.l.b16 %v1130
    %v1167 = vunpack.c.l.b16 %v1131
    %v1168 = vunpack.c.l.b16 %v1132
    %v1169 = vunpack.c.l.b16 %v1133
    %v1170 = vunpack.c.l.b16 %v1134
    %v1171 = vunpack.c.l.b16 %v1135
    %v1172 = vunpack.c.l.b16 %v1136
    %v1173 = vunpack.c.l.b16 %v1137
    %v1174 = vunpack.c.l.b16 %v1138
    %v1175 = vunpack.c.l.b16 %v1139
    %v1176 = vunpack.c.l.b16 %v1140
    %v1177 = vunpack.c.l.b16 %v1141
    %v1178 = vunpack.c.l.b16 %v1142
    %v1179 = vpack.c.b16 %v1164, %v1163
    %v1180 = vpack.c.b16 %v1166, %v1165
    %v1181 = vpack.c.b16 %v1168, %v1167
    %v1182 = vpack.c.b16 %v1170, %v1169
    %v1183 = vpack.c.b16 %v1172, %v1171
    %v1184 = vpack.c.b16 %v1174, %v1173
    %v1185 = vpack.c.b16 %v1176, %v1175
    %v1186 = vpack.c.b16 %v1178, %v1177
    %1195 = vmatpush.bf16.msra.mxu0 %v1186
    %1196 = vmatpush.bf16.msra.mxu0 %v1185
    %1197 = vmatpush.bf16.msra.mxu0 %v1184
    %1198 = vmatpush.bf16.msra.mxu0 %v1183
    %1199 = vmatpush.bf16.msra.mxu0 %v1182
    %1200 = vmatpush.bf16.msra.mxu0 %v1181
    %1201 = vmatpush.bf16.msra.mxu0 %v1180
    %1202 = vmatpush.bf16.msra.mxu0 %v1179
    %1203 = vmatmul.bf16.gmra.mxu0 %v1126
    %v1204 = vpop.f32.mrf.mxu0
    %v1205 = vadd.f32 %v1145, %v1204
    %v1206 = vpop.f32.mrf.mxu0
    %v1207 = vadd.f32 %v1145, %v1206
    %1208 = vdwg.mxu0
    %v1209 = vadd.f32 %v138, %v1205
    %v1210 = vadd.f32 %v139, %v1207
    %1211 = vadd.xlane.f32.xlu0 %v1209
    %v1212 = vpop.xlane.xlu0 %1211
    %1213 = vadd.xlane.f32.xlu0 %v1210
    %v1214 = vpop.xlane.xlu0 %1213
    %v1215 = vrcp.pop 128.0
    %v1216 = vmul.f32 128.0, %v1215
    %v1217 = vsub.f32 1.0, %v1216
    %v1218 = vmul.f32 %v1215, %v1217
    %v1219 = vadd.f32 %v1215, %v1218
    %vm1220 = vweird.f32 %v1215
    %v1221 = vsel %vm1220, %v1215, %v1219
    %v1222 = vmul.f32 %v1212, %v1221
    %v1223 = vmul.f32 %v1214, %v1221
    %v1224 = vsub.f32 %v1209, %v1222
    %v1225 = vsub.f32 %v1210, %v1223
    %v1226 = vmul.f32 %v1224, %v1224
    %v1227 = vmul.f32 %v1225, %v1225
    %1228 = vadd.xlane.f32.xlu0 %v1226
    %v1229 = vpop.xlane.xlu0 %1228
    %1230 = vadd.xlane.f32.xlu0 %v1227
    %v1231 = vpop.xlane.xlu0 %1230
    %v1232 = vmul.f32 %v1229, %v1221
    %v1233 = vmul.f32 %v1231, %v1221
    %v1234 = vadd.f32 %v1232, 1e-05
    %v1235 = vadd.f32 %v1233, 1e-05
    %v1236 = vrsqrt.pop %v1234
    %v1237 = vmul.f32 %v1236, %v1234
    %v1238 = vmul.f32 %v1237, %v1236
    %v1239 = vmul.f32 0.5, %v1238
    %v1240 = vsub.f32 1.5, %v1239
    %v1241 = vmul.f32 %v1236, %v1240
    %vm1242 = vweird.f32 %v1234
    %vm1243 = vweird.f32 %v1236
    %vm1244 = vmor %vm1242, %vm1243
    %v1245 = vsel %vm1244, %v1236, %v1241
    %v1246 = vrsqrt.pop %v1235
    %v1247 = vmul.f32 %v1246, %v1235
    %v1248 = vmul.f32 %v1247, %v1246
    %v1249 = vmul.f32 0.5, %v1248
    %v1250 = vsub.f32 1.5, %v1249
    %v1251 = vmul.f32 %v1246, %v1250
    %vm1252 = vweird.f32 %v1235
    %vm1253 = vweird.f32 %v1246
    %vm1254 = vmor %vm1252, %vm1253
    %v1255 = vsel %vm1254, %v1246, %v1251
    %v1256 = vmul.f32 %v1224, %v1245
    %v1257 = vmul.f32 %v1225, %v1255
    %v1258 = vld [vmem:[%s6] sm:$0x1]
    %v1260 = vperm.slane %v1258, 0
    %v1262 = vmul.f32 %v1256, %v1260
    %v1263 = vmul.f32 %v1257, %v1260
    %v1264 = vld [vmem:[%s7] sm:$0x1]
    %v1266 = vperm.slane %v1264, 0
    %v1268 = vadd.f32 %v1262, %v1266
    %v1269 = vadd.f32 %v1263, %v1266
    %v1270 = vpack.c.bf16 %v1269, %v1268
    %v1271 = vld [vmem:[#allocation7] sm:$0xff]
    %v1272 = vld [vmem:[#allocation7 + $0x8] sm:$0xff]
    %v1273 = vld [vmem:[#allocation7 + $0x10] sm:$0xff]
    %v1274 = vld [vmem:[#allocation7 + $0x18] sm:$0xff]
    %v1275 = vld [vmem:[#allocation7 + $0x20] sm:$0xff]
    %v1276 = vld [vmem:[#allocation7 + $0x28] sm:$0xff]
    %v1277 = vld [vmem:[#allocation7 + $0x30] sm:$0xff]
    %v1278 = vld [vmem:[#allocation7 + $0x38] sm:$0xff]
    %v1279 = vld [vmem:[#allocation7 + $0x40] sm:$0xff]
    %v1280 = vld [vmem:[#allocation7 + $0x48] sm:$0xff]
    %v1281 = vld [vmem:[#allocation7 + $0x50] sm:$0xff]
    %v1282 = vld [vmem:[#allocation7 + $0x58] sm:$0xff]
    %v1283 = vld [vmem:[#allocation7 + $0x60] sm:$0xff]
    %v1284 = vld [vmem:[#allocation7 + $0x68] sm:$0xff]
    %v1285 = vld [vmem:[#allocation7 + $0x70] sm:$0xff]
    %v1286 = vld [vmem:[#allocation7 + $0x78] sm:$0xff]
    %v1287 = vld [vmem:[#allocation7 + $0x80] sm:$0xff]
    %v1288 = vld [vmem:[#allocation7 + $0x88] sm:$0xff]
    %v1289 = vld [vmem:[#allocation7 + $0x90] sm:$0xff]
    %v1290 = vld [vmem:[#allocation7 + $0x98] sm:$0xff]
    %v1291 = vld [vmem:[#allocation7 + $0xa0] sm:$0xff]
    %v1292 = vld [vmem:[#allocation7 + $0xa8] sm:$0xff]
    %v1293 = vld [vmem:[#allocation7 + $0xb0] sm:$0xff]
    %v1294 = vld [vmem:[#allocation7 + $0xb8] sm:$0xff]
    %v1295 = vld [vmem:[#allocation7 + $0xc0] sm:$0xff]
    %v1296 = vld [vmem:[#allocation7 + $0xc8] sm:$0xff]
    %v1297 = vld [vmem:[#allocation7 + $0xd0] sm:$0xff]
    %v1298 = vld [vmem:[#allocation7 + $0xd8] sm:$0xff]
    %v1299 = vld [vmem:[#allocation7 + $0xe0] sm:$0xff]
    %v1300 = vld [vmem:[#allocation7 + $0xe8] sm:$0xff]
    %v1301 = vld [vmem:[#allocation7 + $0xf0] sm:$0xff]
    %v1302 = vld [vmem:[#allocation7 + $0xf8] sm:$0xff]
    %v1303 = vld [vmem:[%s9] sm:$0xf]
    %v1305 = vperm.slane %v1303, 0
    %v1306 = vperm.slane %v1303, 1
    %v1307 = vperm.slane %v1303, 2
    %v1308 = vperm.slane %v1303, 3
    %v1345 = vunpack.c.l.b16 %v1271
    %v1346 = vunpack.c.h.b16 %v1271
    %v1347 = vunpack.c.l.b16 %v1272
    %v1348 = vunpack.c.h.b16 %v1272
    %v1349 = vunpack.c.l.b16 %v1273
    %v1350 = vunpack.c.h.b16 %v1273
    %v1351 = vunpack.c.l.b16 %v1274
    %v1352 = vunpack.c.h.b16 %v1274
    %v1353 = vunpack.c.l.b16 %v1275
    %v1354 = vunpack.c.h.b16 %v1275
    %v1355 = vunpack.c.l.b16 %v1276
    %v1356 = vunpack.c.h.b16 %v1276
    %v1357 = vunpack.c.l.b16 %v1277
    %v1358 = vunpack.c.h.b16 %v1277
    %v1359 = vunpack.c.l.b16 %v1278
    %v1360 = vunpack.c.h.b16 %v1278
    %v1361 = vunpack.c.l.b16 %v1279
    %v1362 = vunpack.c.h.b16 %v1279
    %v1363 = vunpack.c.l.b16 %v1280
    %v1364 = vunpack.c.h.b16 %v1280
    %v1365 = vunpack.c.l.b16 %v1281
    %v1366 = vunpack.c.h.b16 %v1281
    %v1367 = vunpack.c.l.b16 %v1282
    %v1368 = vunpack.c.h.b16 %v1282
    %v1369 = vunpack.c.l.b16 %v1283
    %v1370 = vunpack.c.h.b16 %v1283
    %v1371 = vunpack.c.l.b16 %v1284
    %v1372 = vunpack.c.h.b16 %v1284
    %v1373 = vunpack.c.l.b16 %v1285
    %v1374 = vunpack.c.h.b16 %v1285
    %v1375 = vunpack.c.l.b16 %v1286
    %v1376 = vunpack.c.h.b16 %v1286
    %v1377 = vunpack.c.l.b16 %v1287
    %v1378 = vunpack.c.h.b16 %v1287
    %v1379 = vunpack.c.l.b16 %v1288
    %v1380 = vunpack.c.h.b16 %v1288
    %v1381 = vunpack.c.l.b16 %v1289
    %v1382 = vunpack.c.h.b16 %v1289
    %v1383 = vunpack.c.l.b16 %v1290
    %v1384 = vunpack.c.h.b16 %v1290
    %v1385 = vunpack.c.l.b16 %v1291
    %v1386 = vunpack.c.h.b16 %v1291
    %v1387 = vunpack.c.l.b16 %v1292
    %v1388 = vunpack.c.h.b16 %v1292
    %v1389 = vunpack.c.l.b16 %v1293
    %v1390 = vunpack.c.h.b16 %v1293
    %v1391 = vunpack.c.l.b16 %v1294
    %v1392 = vunpack.c.h.b16 %v1294
    %v1393 = vunpack.c.l.b16 %v1295
    %v1394 = vunpack.c.h.b16 %v1295
    %v1395 = vunpack.c.l.b16 %v1296
    %v1396 = vunpack.c.h.b16 %v1296
    %v1397 = vunpack.c.l.b16 %v1297
    %v1398 = vunpack.c.h.b16 %v1297
    %v1399 = vunpack.c.l.b16 %v1298
    %v1400 = vunpack.c.h.b16 %v1298
    %v1401 = vunpack.c.l.b16 %v1299
    %v1402 = vunpack.c.h.b16 %v1299
    %v1403 = vunpack.c.l.b16 %v1300
    %v1404 = vunpack.c.h.b16 %v1300
    %v1405 = vunpack.c.l.b16 %v1301
    %v1406 = vunpack.c.h.b16 %v1301
    %v1407 = vunpack.c.l.b16 %v1302
    %v1408 = vunpack.c.h.b16 %v1302
    %v1409 = vpack.c.b16 %v1349, %v1345
    %v1410 = vpack.c.b16 %v1350, %v1346
    %v1411 = vpack.c.b16 %v1351, %v1347
    %v1412 = vpack.c.b16 %v1352, %v1348
    %v1413 = vpack.c.b16 %v1357, %v1353
    %v1414 = vpack.c.b16 %v1358, %v1354
    %v1415 = vpack.c.b16 %v1359, %v1355
    %v1416 = vpack.c.b16 %v1360, %v1356
    %v1417 = vpack.c.b16 %v1365, %v1361
    %v1418 = vpack.c.b16 %v1366, %v1362
    %v1419 = vpack.c.b16 %v1367, %v1363
    %v1420 = vpack.c.b16 %v1368, %v1364
    %v1421 = vpack.c.b16 %v1373, %v1369
    %v1422 = vpack.c.b16 %v1374, %v1370
    %v1423 = vpack.c.b16 %v1375, %v1371
    %v1424 = vpack.c.b16 %v1376, %v1372
    %v1425 = vpack.c.b16 %v1381, %v1377
    %v1426 = vpack.c.b16 %v1382, %v1378
    %v1427 = vpack.c.b16 %v1383, %v1379
    %v1428 = vpack.c.b16 %v1384, %v1380
    %v1429 = vpack.c.b16 %v1389, %v1385
    %v1430 = vpack.c.b16 %v1390, %v1386
    %v1431 = vpack.c.b16 %v1391, %v1387
    %v1432 = vpack.c.b16 %v1392, %v1388
    %v1433 = vpack.c.b16 %v1397, %v1393
    %v1434 = vpack.c.b16 %v1398, %v1394
    %v1435 = vpack.c.b16 %v1399, %v1395
    %v1436 = vpack.c.b16 %v1400, %v1396
    %v1437 = vpack.c.b16 %v1405, %v1401
    %v1438 = vpack.c.b16 %v1406, %v1402
    %v1439 = vpack.c.b16 %v1407, %v1403
    %v1440 = vpack.c.b16 %v1408, %v1404
    %1473 = vmatpush.bf16.msra.mxu0 %v1437
    %1474 = vmatpush.bf16.msra.mxu0 %v1433
    %1475 = vmatpush.bf16.msra.mxu0 %v1429
    %1476 = vmatpush.bf16.msra.mxu0 %v1425
    %1477 = vmatpush.bf16.msra.mxu0 %v1421
    %1478 = vmatpush.bf16.msra.mxu0 %v1417
    %1479 = vmatpush.bf16.msra.mxu0 %v1413
    %1480 = vmatpush.bf16.msra.mxu0 %v1409
    %1481 = vmatmul.bf16.gmra.mxu0 %v1270
    %v1482 = vpop.f32.mrf.mxu0
    %v1483 = vadd.f32 %v1305, %v1482
    %v1484 = vpop.f32.mrf.mxu0
    %v1485 = vadd.f32 %v1305, %v1484
    %1486 = vdwg.mxu0
    %1487 = vmatpush.bf16.msra.mxu0 %v1438
    %1488 = vmatpush.bf16.msra.mxu0 %v1434
    %1489 = vmatpush.bf16.msra.mxu0 %v1430
    %1490 = vmatpush.bf16.msra.mxu0 %v1426
    %1491 = vmatpush.bf16.msra.mxu0 %v1422
    %1492 = vmatpush.bf16.msra.mxu0 %v1418
    %1493 = vmatpush.bf16.msra.mxu0 %v1414
    %1494 = vmatpush.bf16.msra.mxu0 %v1410
    %1495 = vmatmul.bf16.gmra.mxu0 %v1270
    %v1496 = vpop.f32.mrf.mxu0
    %v1497 = vadd.f32 %v1306, %v1496
    %v1498 = vpop.f32.mrf.mxu0
    %v1499 = vadd.f32 %v1306, %v1498
    %1500 = vdwg.mxu0
    %1501 = vmatpush.bf16.msra.mxu0 %v1439
    %1502 = vmatpush.bf16.msra.mxu0 %v1435
    %1503 = vmatpush.bf16.msra.mxu0 %v1431
    %1504 = vmatpush.bf16.msra.mxu0 %v1427
    %1505 = vmatpush.bf16.msra.mxu0 %v1423
    %1506 = vmatpush.bf16.msra.mxu0 %v1419
    %1507 = vmatpush.bf16.msra.mxu0 %v1415
    %1508 = vmatpush.bf16.msra.mxu0 %v1411
    %1509 = vmatmul.bf16.gmra.mxu0 %v1270
    %v1510 = vpop.f32.mrf.mxu0
    %v1511 = vadd.f32 %v1307, %v1510
    %v1512 = vpop.f32.mrf.mxu0
    %v1513 = vadd.f32 %v1307, %v1512
    %1514 = vdwg.mxu0
    %1515 = vmatpush.bf16.msra.mxu0 %v1440
    %1516 = vmatpush.bf16.msra.mxu0 %v1436
    %1517 = vmatpush.bf16.msra.mxu0 %v1432
    %1518 = vmatpush.bf16.msra.mxu0 %v1428
    %1519 = vmatpush.bf16.msra.mxu0 %v1424
    %1520 = vmatpush.bf16.msra.mxu0 %v1420
    %1521 = vmatpush.bf16.msra.mxu0 %v1416
    %1522 = vmatpush.bf16.msra.mxu0 %v1412
    %1523 = vmatmul.bf16.gmra.mxu0 %v1270
    %v1524 = vpop.f32.mrf.mxu0
    %v1525 = vadd.f32 %v1308, %v1524
    %v1526 = vpop.f32.mrf.mxu0
    %v1527 = vadd.f32 %v1308, %v1526
    %1528 = vdwg.mxu0
    %v1529 = vmax.f32 %v1483, 0.0
    %v1530 = vmax.f32 %v1497, 0.0
    %v1531 = vmax.f32 %v1511, 0.0
    %v1532 = vmax.f32 %v1525, 0.0
    %v1533 = vmax.f32 %v1485, 0.0
    %v1534 = vmax.f32 %v1499, 0.0
    %v1535 = vmax.f32 %v1513, 0.0
    %v1536 = vmax.f32 %v1527, 0.0
    %v1537 = vpack.c.bf16 %v1533, %v1529
    %v1538 = vpack.c.bf16 %v1534, %v1530
    %v1539 = vpack.c.bf16 %v1535, %v1531
    %v1540 = vpack.c.bf16 %v1536, %v1532
    %v1541 = vld [vmem:[#allocation8] sm:$0xf]
    %v1542 = vld [vmem:[#allocation8 + $0x4] sm:$0xf]
    %v1543 = vld [vmem:[#allocation8 + $0x8] sm:$0xf]
    %v1544 = vld [vmem:[#allocation8 + $0xc] sm:$0xf]
    %v1545 = vld [vmem:[#allocation8 + $0x10] sm:$0xf]
    %v1546 = vld [vmem:[#allocation8 + $0x14] sm:$0xf]
    %v1547 = vld [vmem:[#allocation8 + $0x18] sm:$0xf]
    %v1548 = vld [vmem:[#allocation8 + $0x1c] sm:$0xf]
    %v1549 = vld [vmem:[#allocation8 + $0x20] sm:$0xf]
    %v1550 = vld [vmem:[#allocation8 + $0x24] sm:$0xf]
    %v1551 = vld [vmem:[#allocation8 + $0x28] sm:$0xf]
    %v1552 = vld [vmem:[#allocation8 + $0x2c] sm:$0xf]
    %v1553 = vld [vmem:[#allocation8 + $0x30] sm:$0xf]
    %v1554 = vld [vmem:[#allocation8 + $0x34] sm:$0xf]
    %v1555 = vld [vmem:[#allocation8 + $0x38] sm:$0xf]
    %v1556 = vld [vmem:[#allocation8 + $0x3c] sm:$0xf]
    %v1557 = vld [vmem:[#allocation8 + $0x40] sm:$0xf]
    %v1558 = vld [vmem:[#allocation8 + $0x44] sm:$0xf]
    %v1559 = vld [vmem:[#allocation8 + $0x48] sm:$0xf]
    %v1560 = vld [vmem:[#allocation8 + $0x4c] sm:$0xf]
    %v1561 = vld [vmem:[#allocation8 + $0x50] sm:$0xf]
    %v1562 = vld [vmem:[#allocation8 + $0x54] sm:$0xf]
    %v1563 = vld [vmem:[#allocation8 + $0x58] sm:$0xf]
    %v1564 = vld [vmem:[#allocation8 + $0x5c] sm:$0xf]
    %v1565 = vld [vmem:[#allocation8 + $0x60] sm:$0xf]
    %v1566 = vld [vmem:[#allocation8 + $0x64] sm:$0xf]
    %v1567 = vld [vmem:[#allocation8 + $0x68] sm:$0xf]
    %v1568 = vld [vmem:[#allocation8 + $0x6c] sm:$0xf]
    %v1569 = vld [vmem:[#allocation8 + $0x70] sm:$0xf]
    %v1570 = vld [vmem:[#allocation8 + $0x74] sm:$0xf]
    %v1571 = vld [vmem:[#allocation8 + $0x78] sm:$0xf]
    %v1572 = vld [vmem:[#allocation8 + $0x7c] sm:$0xf]
    %v1573 = vld [vmem:[#allocation8 + $0x80] sm:$0xf]
    %v1574 = vld [vmem:[#allocation8 + $0x84] sm:$0xf]
    %v1575 = vld [vmem:[#allocation8 + $0x88] sm:$0xf]
    %v1576 = vld [vmem:[#allocation8 + $0x8c] sm:$0xf]
    %v1577 = vld [vmem:[#allocation8 + $0x90] sm:$0xf]
    %v1578 = vld [vmem:[#allocation8 + $0x94] sm:$0xf]
    %v1579 = vld [vmem:[#allocation8 + $0x98] sm:$0xf]
    %v1580 = vld [vmem:[#allocation8 + $0x9c] sm:$0xf]
    %v1581 = vld [vmem:[#allocation8 + $0xa0] sm:$0xf]
    %v1582 = vld [vmem:[#allocation8 + $0xa4] sm:$0xf]
    %v1583 = vld [vmem:[#allocation8 + $0xa8] sm:$0xf]
    %v1584 = vld [vmem:[#allocation8 + $0xac] sm:$0xf]
    %v1585 = vld [vmem:[#allocation8 + $0xb0] sm:$0xf]
    %v1586 = vld [vmem:[#allocation8 + $0xb4] sm:$0xf]
    %v1587 = vld [vmem:[#allocation8 + $0xb8] sm:$0xf]
    %v1588 = vld [vmem:[#allocation8 + $0xbc] sm:$0xf]
    %v1589 = vld [vmem:[#allocation8 + $0xc0] sm:$0xf]
    %v1590 = vld [vmem:[#allocation8 + $0xc4] sm:$0xf]
    %v1591 = vld [vmem:[#allocation8 + $0xc8] sm:$0xf]
    %v1592 = vld [vmem:[#allocation8 + $0xcc] sm:$0xf]
    %v1593 = vld [vmem:[#allocation8 + $0xd0] sm:$0xf]
    %v1594 = vld [vmem:[#allocation8 + $0xd4] sm:$0xf]
    %v1595 = vld [vmem:[#allocation8 + $0xd8] sm:$0xf]
    %v1596 = vld [vmem:[#allocation8 + $0xdc] sm:$0xf]
    %v1597 = vld [vmem:[#allocation8 + $0xe0] sm:$0xf]
    %v1598 = vld [vmem:[#allocation8 + $0xe4] sm:$0xf]
    %v1599 = vld [vmem:[#allocation8 + $0xe8] sm:$0xf]
    %v1600 = vld [vmem:[#allocation8 + $0xec] sm:$0xf]
    %v1601 = vld [vmem:[#allocation8 + $0xf0] sm:$0xf]
    %v1602 = vld [vmem:[#allocation8 + $0xf4] sm:$0xf]
    %v1603 = vld [vmem:[#allocation8 + $0xf8] sm:$0xf]
    %v1604 = vld [vmem:[#allocation8 + $0xfc] sm:$0xf]
    %v1605 = vld [vmem:[%s11] sm:$0x1]
    %v1607 = vperm.slane %v1605, 0
    %v1673 = vunpack.c.l.b16 %v1541
    %v1674 = vunpack.c.l.b16 %v1542
    %v1675 = vunpack.c.l.b16 %v1543
    %v1676 = vunpack.c.l.b16 %v1544
    %v1677 = vunpack.c.l.b16 %v1545
    %v1678 = vunpack.c.l.b16 %v1546
    %v1679 = vunpack.c.l.b16 %v1547
    %v1680 = vunpack.c.l.b16 %v1548
    %v1681 = vunpack.c.l.b16 %v1549
    %v1682 = vunpack.c.l.b16 %v1550
    %v1683 = vunpack.c.l.b16 %v1551
    %v1684 = vunpack.c.l.b16 %v1552
    %v1685 = vunpack.c.l.b16 %v1553
    %v1686 = vunpack.c.l.b16 %v1554
    %v1687 = vunpack.c.l.b16 %v1555
    %v1688 = vunpack.c.l.b16 %v1556
    %v1689 = vunpack.c.l.b16 %v1557
    %v1690 = vunpack.c.l.b16 %v1558
    %v1691 = vunpack.c.l.b16 %v1559
    %v1692 = vunpack.c.l.b16 %v1560
    %v1693 = vunpack.c.l.b16 %v1561
    %v1694 = vunpack.c.l.b16 %v1562
    %v1695 = vunpack.c.l.b16 %v1563
    %v1696 = vunpack.c.l.b16 %v1564
    %v1697 = vunpack.c.l.b16 %v1565
    %v1698 = vunpack.c.l.b16 %v1566
    %v1699 = vunpack.c.l.b16 %v1567
    %v1700 = vunpack.c.l.b16 %v1568
    %v1701 = vunpack.c.l.b16 %v1569
    %v1702 = vunpack.c.l.b16 %v1570
    %v1703 = vunpack.c.l.b16 %v1571
    %v1704 = vunpack.c.l.b16 %v1572
    %v1705 = vunpack.c.l.b16 %v1573
    %v1706 = vunpack.c.l.b16 %v1574
    %v1707 = vunpack.c.l.b16 %v1575
    %v1708 = vunpack.c.l.b16 %v1576
    %v1709 = vunpack.c.l.b16 %v1577
    %v1710 = vunpack.c.l.b16 %v1578
    %v1711 = vunpack.c.l.b16 %v1579
    %v1712 = vunpack.c.l.b16 %v1580
    %v1713 = vunpack.c.l.b16 %v1581
    %v1714 = vunpack.c.l.b16 %v1582
    %v1715 = vunpack.c.l.b16 %v1583
    %v1716 = vunpack.c.l.b16 %v1584
    %v1717 = vunpack.c.l.b16 %v1585
    %v1718 = vunpack.c.l.b16 %v1586
    %v1719 = vunpack.c.l.b16 %v1587
    %v1720 = vunpack.c.l.b16 %v1588
    %v1721 = vunpack.c.l.b16 %v1589
    %v1722 = vunpack.c.l.b16 %v1590
    %v1723 = vunpack.c.l.b16 %v1591
    %v1724 = vunpack.c.l.b16 %v1592
    %v1725 = vunpack.c.l.b16 %v1593
    %v1726 = vunpack.c.l.b16 %v1594
    %v1727 = vunpack.c.l.b16 %v1595
    %v1728 = vunpack.c.l.b16 %v1596
    %v1729 = vunpack.c.l.b16 %v1597
    %v1730 = vunpack.c.l.b16 %v1598
    %v1731 = vunpack.c.l.b16 %v1599
    %v1732 = vunpack.c.l.b16 %v1600
    %v1733 = vunpack.c.l.b16 %v1601
    %v1734 = vunpack.c.l.b16 %v1602
    %v1735 = vunpack.c.l.b16 %v1603
    %v1736 = vunpack.c.l.b16 %v1604
    %v1737 = vpack.c.b16 %v1674, %v1673
    %v1738 = vpack.c.b16 %v1676, %v1675
    %v1739 = vpack.c.b16 %v1678, %v1677
    %v1740 = vpack.c.b16 %v1680, %v1679
    %v1741 = vpack.c.b16 %v1682, %v1681
    %v1742 = vpack.c.b16 %v1684, %v1683
    %v1743 = vpack.c.b16 %v1686, %v1685
    %v1744 = vpack.c.b16 %v1688, %v1687
    %v1745 = vpack.c.b16 %v1690, %v1689
    %v1746 = vpack.c.b16 %v1692, %v1691
    %v1747 = vpack.c.b16 %v1694, %v1693
    %v1748 = vpack.c.b16 %v1696, %v1695
    %v1749 = vpack.c.b16 %v1698, %v1697
    %v1750 = vpack.c.b16 %v1700, %v1699
    %v1751 = vpack.c.b16 %v1702, %v1701
    %v1752 = vpack.c.b16 %v1704, %v1703
    %v1753 = vpack.c.b16 %v1706, %v1705
    %v1754 = vpack.c.b16 %v1708, %v1707
    %v1755 = vpack.c.b16 %v1710, %v1709
    %v1756 = vpack.c.b16 %v1712, %v1711
    %v1757 = vpack.c.b16 %v1714, %v1713
    %v1758 = vpack.c.b16 %v1716, %v1715
    %v1759 = vpack.c.b16 %v1718, %v1717
    %v1760 = vpack.c.b16 %v1720, %v1719
    %v1761 = vpack.c.b16 %v1722, %v1721
    %v1762 = vpack.c.b16 %v1724, %v1723
    %v1763 = vpack.c.b16 %v1726, %v1725
    %v1764 = vpack.c.b16 %v1728, %v1727
    %v1765 = vpack.c.b16 %v1730, %v1729
    %v1766 = vpack.c.b16 %v1732, %v1731
    %v1767 = vpack.c.b16 %v1734, %v1733
    %v1768 = vpack.c.b16 %v1736, %v1735
    %1801 = vmatpush.bf16.msra.mxu0 %v1744
    %1802 = vmatpush.bf16.msra.mxu0 %v1743
    %1803 = vmatpush.bf16.msra.mxu0 %v1742
    %1804 = vmatpush.bf16.msra.mxu0 %v1741
    %1805 = vmatpush.bf16.msra.mxu0 %v1740
    %1806 = vmatpush.bf16.msra.mxu0 %v1739
    %1807 = vmatpush.bf16.msra.mxu0 %v1738
    %1808 = vmatpush.bf16.msra.mxu0 %v1737
    %1809 = vmatmul.bf16.gmra.mxu0 %v1537
    %v1810 = vpop.f32.mrf.mxu0
    %v1811 = vadd.f32 %v1607, %v1810
    %v1812 = vpop.f32.mrf.mxu0
    %v1813 = vadd.f32 %v1607, %v1812
    %1814 = vdwg.mxu0
    %1815 = vmatpush.bf16.msra.mxu0 %v1752
    %1816 = vmatpush.bf16.msra.mxu0 %v1751
    %1817 = vmatpush.bf16.msra.mxu0 %v1750
    %1818 = vmatpush.bf16.msra.mxu0 %v1749
    %1819 = vmatpush.bf16.msra.mxu0 %v1748
    %1820 = vmatpush.bf16.msra.mxu0 %v1747
    %1821 = vmatpush.bf16.msra.mxu0 %v1746
    %1822 = vmatpush.bf16.msra.mxu0 %v1745
    %1823 = vmatmul.bf16.gmra.mxu0 %v1538
    %v1824 = vpop.f32.mrf.mxu0
    %v1825 = vadd.f32 %v1811, %v1824
    %v1826 = vpop.f32.mrf.mxu0
    %v1827 = vadd.f32 %v1813, %v1826
    %1828 = vdwg.mxu0
    %1829 = vmatpush.bf16.msra.mxu0 %v1760
    %1830 = vmatpush.bf16.msra.mxu0 %v1759
    %1831 = vmatpush.bf16.msra.mxu0 %v1758
    %1832 = vmatpush.bf16.msra.mxu0 %v1757
    %1833 = vmatpush.bf16.msra.mxu0 %v1756
    %1834 = vmatpush.bf16.msra.mxu0 %v1755
    %1835 = vmatpush.bf16.msra.mxu0 %v1754
    %1836 = vmatpush.bf16.msra.mxu0 %v1753
    %1837 = vmatmul.bf16.gmra.mxu0 %v1539
    %v1838 = vpop.f32.mrf.mxu0
    %v1839 = vadd.f32 %v1825, %v1838
    %v1840 = vpop.f32.mrf.mxu0
    %v1841 = vadd.f32 %v1827, %v1840
    %1842 = vdwg.mxu0
    %1843 = vmatpush.bf16.msra.mxu0 %v1768
    %1844 = vmatpush.bf16.msra.mxu0 %v1767
    %1845 = vmatpush.bf16.msra.mxu0 %v1766
    %1846 = vmatpush.bf16.msra.mxu0 %v1765
    %1847 = vmatpush.bf16.msra.mxu0 %v1764
    %1848 = vmatpush.bf16.msra.mxu0 %v1763
    %1849 = vmatpush.bf16.msra.mxu0 %v1762
    %1850 = vmatpush.bf16.msra.mxu0 %v1761
    %1851 = vmatmul.bf16.gmra.mxu0 %v1540
    %v1852 = vpop.f32.mrf.mxu0
    %v1853 = vadd.f32 %v1839, %v1852
    %v1854 = vpop.f32.mrf.mxu0
    %v1855 = vadd.f32 %v1841, %v1854
    %1856 = vdwg.mxu0
    %v1857 = vadd.f32 %v1268, %v1853
    %v1858 = vadd.f32 %v1269, %v1855
    %1859 = vadd.xlane.f32.xlu0 %v1857
    %v1860 = vpop.xlane.xlu0 %1859
    %1861 = vadd.xlane.f32.xlu0 %v1858
    %v1862 = vpop.xlane.xlu0 %1861
    %v1863 = vmul.f32 %v1860, %v1221
    %v1864 = vmul.f32 %v1862, %v1221
    %v1865 = vsub.f32 %v1857, %v1863
    %v1866 = vsub.f32 %v1858, %v1864
    %v1867 = vmul.f32 %v1865, %v1865
    %v1868 = vmul.f32 %v1866, %v1866
    %1869 = vadd.xlane.f32.xlu0 %v1867
    %v1870 = vpop.xlane.xlu0 %1869
    %1871 = vadd.xlane.f32.xlu0 %v1868
    %v1872 = vpop.xlane.xlu0 %1871
    %v1873 = vmul.f32 %v1870, %v1221
    %v1874 = vmul.f32 %v1872, %v1221
    %v1875 = vadd.f32 %v1873, 1e-05
    %v1876 = vadd.f32 %v1874, 1e-05
    %v1877 = vrsqrt.pop %v1875
    %v1878 = vmul.f32 %v1877, %v1875
    %v1879 = vmul.f32 %v1878, %v1877
    %v1880 = vmul.f32 0.5, %v1879
    %v1881 = vsub.f32 1.5, %v1880
    %v1882 = vmul.f32 %v1877, %v1881
    %vm1883 = vweird.f32 %v1875
    %vm1884 = vweird.f32 %v1877
    %vm1885 = vmor %vm1883, %vm1884
    %v1886 = vsel %vm1885, %v1877, %v1882
    %v1887 = vrsqrt.pop %v1876
    %v1888 = vmul.f32 %v1887, %v1876
    %v1889 = vmul.f32 %v1888, %v1887
    %v1890 = vmul.f32 0.5, %v1889
    %v1891 = vsub.f32 1.5, %v1890
    %v1892 = vmul.f32 %v1887, %v1891
    %vm1893 = vweird.f32 %v1876
    %vm1894 = vweird.f32 %v1887
    %vm1895 = vmor %vm1893, %vm1894
    %v1896 = vsel %vm1895, %v1887, %v1892
    %v1897 = vmul.f32 %v1865, %v1886
    %v1898 = vmul.f32 %v1866, %v1896
    %v1899 = vld [vmem:[#allocation10] sm:$0x1]
    %v1901 = vperm.slane %v1899, 0
    %v1903 = vmul.f32 %v1897, %v1901
    %v1904 = vmul.f32 %v1898, %v1901
    %v1905 = vld [vmem:[#allocation11] sm:$0x1]
    %v1907 = vperm.slane %v1905, 0
    %v1909 = vadd.f32 %v1903, %v1907
    %v1910 = vadd.f32 %v1904, %v1907
    %1911 = vst [vmem:[#allocation13] sm:$0xff] %v1909
    %1912 = vst [vmem:[#allocation13 + $0x8] sm:$0xff] %v1910
    // Predicated region
    $region82: #{encoder_layer.1} parent=1 // pred_check
      _
    $region83: #{encoder_layer.1} parent=1 // pred_check_branch
      %1914 = sbr.rel (0) target = $region85
    $region84: #{encoder_layer.1} parent=1 // pred_region
      %1916 = vsyncadd [#allocation4], 0
      %s1917 = sshll.u32 [#allocation13], 4
      %s1918 = int_to_ptr.vmem [resolvable:$true] %s1917
      %s1919 = sshll.u32 %s14, 4
      %s1920 = int_to_ptr.hbm [resolvable:$true] %s1919
      %1925 = dma.vmem_to_hbm [thread:$0]  %s1918, 256, %s1920, [#allocation4], 128, 128, 8
    $region85: #{encoder_layer.1} parent=1 // pred_fallthru
      _
    // Predicated region
    $region86: #{encoder_layer.1} parent=1 // pred_check
      _
    $region87: #{encoder_layer.1} parent=1 // pred_check_branch
      %1927 = sbr.rel (0) target = $region89
    $region88: #{encoder_layer.1} parent=1 // pred_region
      %1929 = dma.done [#allocation4], 256
    $region89: #{encoder_layer.1} parent=1 // pred_fallthru
      _
    %1930 = vsyncpa [#allocation3], 1
    %1931 = vsyncpa [#allocation6], 1
    %1932 = vsyncpa [#allocation9], 1
    %1933 = vsyncpa [#allocation12], 1
    %1934 = vsyncpa [#allocation4], 1

</llo_original>
